<compile_context>
chip_gen: v6e
topology: v6e:2x2x1
jax: 0.10.0
libtpu: 0.0.40
codegen_flags: <defaults>
</compile_context>

<pallas_src>
import numpy as np
import jax
import jax.numpy as jnp
from jax.experimental import pallas as pl
from jax.experimental.pallas import tpu as pltpu


def _round_up(x, m):
    return ((x + m - 1) // m) * m


# ----------------------------- kernels ---------------------------------------


def _stn_conv_pool_kernel(x_ref,
                          w1_ref, b1_ref, w2_ref, b2_ref, w3_ref, b3_ref,
                          pool_ref):
    """conv1->conv2->conv3 (1x1 convs as matmuls) + running max-pool over points.

    Invariant: pool_ref is initialised to 0 and b3 is added AFTER the per-tile max,
    so max(0, .) supplies the final ReLU (bias/ReLU hoist past the pool).
    """
    t = pl.program_id(1)

    @pl.when(t == 0)
    def _init():
        pool_ref[...] = jnp.zeros(pool_ref.shape, pool_ref.dtype)

    x = x_ref[0]                                          # (tile_n, k) bf16

    # conv1 + bn1 + relu (BN folded; out channels zero-padded 64 -> 128 for lane density)
    h = jnp.dot(x, w1_ref[...], preferred_element_type=jnp.float32) + b1_ref[...]
    h = jnp.maximum(h, 0.0)
    # conv2 + bn2 + relu
    h = jnp.dot(h.astype(jnp.bfloat16), w2_ref[...],
                preferred_element_type=jnp.float32) + b2_ref[...]
    h = jnp.maximum(h, 0.0)
    # conv3: raw matmul only (bias + ReLU hoisted past the max-pool)
    h = jnp.dot(h.astype(jnp.bfloat16), w3_ref[...],
                preferred_element_type=jnp.float32)       # (tile_n, 1024) f32

    tile_max = jnp.max(h, axis=0, keepdims=True) + b3_ref[...]    # (1, 1024)
    pool_ref[0] = jnp.maximum(pool_ref[0], tile_max)


def _stn_head_kernel(p_ref, fw1_ref, fb1_ref, fw2_ref, fb2_ref, fw3_ref, fb3_ref,
                     out_ref):
    """fc1->fc2->fc3 head on pooled features, batched over all B at once (M = B)."""
    p = p_ref[...].astype(jnp.bfloat16)                   # (B, 1024)
    f = jnp.dot(p, fw1_ref[...], preferred_element_type=jnp.float32) + fb1_ref[...]
    f = jnp.maximum(f, 0.0)
    f = jnp.dot(f.astype(jnp.bfloat16), fw2_ref[...],
                preferred_element_type=jnp.float32) + fb2_ref[...]
    f = jnp.maximum(f, 0.0)
    # identity matrix already folded (in f32) into fb3
    f = jnp.dot(f.astype(jnp.bfloat16), fw3_ref[...],
                preferred_element_type=jnp.float32) + fb3_ref[...]
    out_ref[...] = f.astype(out_ref.dtype)


# ----------------------------- wrapper ---------------------------------------


def stnkd_forward_pallas(x_bkn, kernel_params, k, tile_n=1024):
    """x_bkn: (B, k, N) float32, PyTorch Conv1d (NCW) layout.  Returns (B, k, k) float32."""
    (w1, b1, w2, b2, w3, b3, fw1, fb1, fw2, fb2, fw3, fb3) = kernel_params
    B, k_in, N = x_bkn.shape
    assert k_in == k
    kk = k * k
    kk_pad = fw3.shape[1]

    # Single fused NCW -> NWC transpose + bf16 cast pass; channel axis is NOT zero-padded.
    x = jnp.transpose(x_bkn, (0, 2, 1)).astype(jnp.bfloat16)      # (B, N, k)

    # Pick the largest point tile <= tile_n (multiple of 128) that keeps padding small.
    n_pad128 = _round_up(N, 128)
    n_tiles = -(-n_pad128 // tile_n)                     # ceil
    tile = _round_up(-(-n_pad128 // n_tiles), 128)
    n_pad = tile * n_tiles
    if n_pad != N:
        # replicate the last point: max-pool over the duplicated set is unchanged
        pad = jnp.broadcast_to(x[:, -1:, :], (B, n_pad - N, k))
        x = jnp.concatenate([x, pad], axis=1)

    def const(shape):
        return pl.BlockSpec(shape, lambda b, t: (0,) * len(shape))

    conv_flops = 2 * B * n_pad * (k * 128 + 128 * 128 + 128 * 1024)
    conv_bytes = (B * n_pad * k * 2
                  + (k * 128 + 128 * 128 + 128 * 1024) * 2
                  + (128 + 128 + 1024) * 4
                  + B * 1024 * 4)

    pooled = pl.pallas_call(
        _stn_conv_pool_kernel,
        out_shape=jax.ShapeDtypeStruct((B, 1, 1024), jnp.float32),
        grid_spec=pltpu.PrefetchScalarGridSpec(
            num_scalar_prefetch=0,
            grid=(B, n_tiles),
            in_specs=[
                pl.BlockSpec((1, tile, k), lambda b, t: (b, t, 0)),
                const(w1.shape), const(b1.shape),
                const(w2.shape), const(b2.shape),
                const(w3.shape), const(b3.shape),
            ],
            out_specs=pl.BlockSpec((1, 1, 1024), lambda b, t: (b, 0, 0)),
        ),
        compiler_params=pltpu.CompilerParams(
            dimension_semantics=("parallel", "arbitrary"),
            # comfortably below v7x's 64 MiB physical VMEM even at tile_n = 2048
            vmem_limit_bytes=48 * 1024 * 1024,
        ),
        cost_estimate=pl.CostEstimate(flops=int(conv_flops), transcendentals=0,
                                      bytes_accessed=int(conv_bytes)),
    )(x, w1, b1, w2, b2, w3, b3)

    pooled2d = pooled.reshape(B, 1024)

    def hconst(shape):
        return pl.BlockSpec(shape, lambda i: (0,) * len(shape))

    head_flops = 2 * B * (1024 * 512 + 512 * 256 + 256 * kk_pad)
    head_bytes = (B * 1024 * 4
                  + (1024 * 512 + 512 * 256 + 256 * kk_pad) * 2
                  + (512 + 256 + kk_pad) * 4
                  + B * kk_pad * 4)

    out = pl.pallas_call(
        _stn_head_kernel,
        out_shape=jax.ShapeDtypeStruct((B, kk_pad), jnp.float32),
        grid_spec=pltpu.PrefetchScalarGridSpec(
            num_scalar_prefetch=0,
            grid=(1,),
            in_specs=[hconst((B, 1024)),
                      hconst(fw1.shape), hconst(fb1.shape),
                      hconst(fw2.shape), hconst(fb2.shape),
                      hconst(fw3.shape), hconst(fb3.shape)],
            out_specs=hconst((B, kk_pad)),
        ),
        compiler_params=pltpu.CompilerParams(
            dimension_semantics=("arbitrary",),
            vmem_limit_bytes=32 * 1024 * 1024,
        ),
        cost_estimate=pl.CostEstimate(flops=int(head_flops), transcendentals=0,
                                      bytes_accessed=int(head_bytes)),
    )(pooled2d, fw1, fb1, fw2, fb2, fw3, fb3)

    return out[:, :kk].reshape(B, k, k)


# ------------------------ parameters & BN folding -----------------------------


def init_params(key, k):
    ks = jax.random.split(key, 24)
    f32 = jnp.float32

    def lin_w(kk_, co, ci):
        return jax.random.normal(kk_, (co, ci), f32) / np.sqrt(ci)

    def bias(kk_, c):
        return 0.1 * jax.random.normal(kk_, (c,), f32)

    def bn(kk_, c):
        kg, kb, km, kv = jax.random.split(kk_, 4)
        gamma = 1.0 + 0.1 * jax.random.normal(kg, (c,), f32)
        beta = 0.1 * jax.random.normal(kb, (c,), f32)
        mean = 0.1 * jax.random.normal(km, (c,), f32)
        var = 1.0 + 0.1 * jnp.abs(jax.random.normal(kv, (c,), f32))
        return gamma, beta, mean, var

    return dict(
        conv1=(lin_w(ks[0], 64, k), bias(ks[1], 64)),
        conv2=(lin_w(ks[2], 128, 64), bias(ks[3], 128)),
        conv3=(lin_w(ks[4], 1024, 128), bias(ks[5], 1024)),
        fc1=(lin_w(ks[6], 512, 1024), bias(ks[7], 512)),
        fc2=(lin_w(ks[8], 256, 512), bias(ks[9], 256)),
        fc3=(lin_w(ks[10], k * k, 256), bias(ks[11], k * k)),
        bn1=bn(ks[12], 64), bn2=bn(ks[13], 128), bn3=bn(ks[14], 1024),
    )


def _fold_bn(w_oi, b_o, bn_params, eps=1e-5):
    gamma, beta, mean, var = bn_params
    s = gamma / jnp.sqrt(var + eps)
    return w_oi * s[:, None], (b_o - mean) * s + beta


def fold_params(p, k):
    """Returns (ref_mats_f32, kernel_arrays).  All matrices are (Cin, Cout) for x @ W."""
    w1, b1 = _fold_bn(*p["conv1"], p["bn1"])
    w2, b2 = _fold_bn(*p["conv2"], p["bn2"])
    w3, b3 = _fold_bn(*p["conv3"], p["bn3"])
    fw1, fb1 = p["fc1"]
    fw2, fb2 = p["fc2"]
    fw3, fb3 = p["fc3"]
    # fold "x + iden" into the fc3 bias (row-major flatten matches view(-1, k, k))
    fb3 = fb3 + jnp.eye(k, dtype=jnp.float32).reshape(-1)

    ref = dict(w1=w1.T, b1=b1, w2=w2.T, b2=b2, w3=w3.T, b3=b3,
               fw1=fw1.T, fb1=fb1, fw2=fw2.T, fb2=fb2, fw3=fw3.T, fb3=fb3)

    f32 = jnp.float32
    kk = k * k
    kk_pad = _round_up(kk, 128)

    # conv1 output channels zero-padded 64 -> 128 (lane-dense h1, K=128 conv2);
    # the matching extra rows of conv2's weight are zero so semantics are unchanged.
    kw1 = jnp.zeros((k, 128), f32).at[:, :64].set(w1.T).astype(jnp.bfloat16)
    kb1 = jnp.zeros((1, 128), f32).at[0, :64].set(b1)
    kw2 = jnp.zeros((128, 128), f32).at[:64, :].set(w2.T).astype(jnp.bfloat16)
    kb2 = b2.reshape(1, -1)
    kw3 = w3.T.astype(jnp.bfloat16)                       # (128, 1024)
    kb3 = b3.reshape(1, -1)                               # (1, 1024) f32 (added post-pool)

    kfw1 = fw1.T.astype(jnp.bfloat16)                     # (1024, 512)
    kfw2 = fw2.T.astype(jnp.bfloat16)                     # (512, 256)
    kfw3 = jnp.zeros((256, kk_pad), f32).at[:, :kk].set(fw3.T).astype(jnp.bfloat16)
    kfb3 = jnp.zeros((1, kk_pad), f32).at[0, :kk].set(fb3)

    kernel_params = (kw1, kb1, kw2, kb2, kw3, kb3,
                     kfw1, fb1.reshape(1, -1), kfw2, fb2.reshape(1, -1), kfw3, kfb3)
    return ref, kernel_params


# ------------------------------ reference ------------------------------------


def stnkd_forward_ref(x_bkn, ref, k):
    x = jnp.transpose(x_bkn, (0, 2, 1)).astype(jnp.float32)   # (B, N, k)
    h = jnp.maximum(x @ ref["w1"] + ref["b1"], 0.0)
    h = jnp.maximum(h @ ref["w2"] + ref["b2"], 0.0)
    h = jnp.maximum(h @ ref["w3"] + ref["b3"], 0.0)
    pooled = jnp.max(h, axis=1)                               # (B, 1024)
    f = jnp.maximum(pooled @ ref["fw1"] + ref["fb1"], 0.0)
    f = jnp.maximum(f @ ref["fw2"] + ref["fb2"], 0.0)
    f = f @ ref["fw3"] + ref["fb3"]                           # identity already folded
    return f.reshape(-1, k, k)


# --------------------------------- main ---------------------------------------


if __name__ == "__main__":
    k = 64            # STNkd default
    B, N = 2, 256     # small deterministic example: (B, k, N) = (2, 64, 256)
    key = jax.random.PRNGKey(0)
    pkey, xkey = jax.random.split(key)

    raw_params = init_params(pkey, k)
    ref_params, kern_params = fold_params(raw_params, k)
    x = jax.random.normal(xkey, (B, k, N), jnp.float32)

    out = stnkd_forward_pallas(x, kern_params, k, tile_n=1024)
    out = jax.block_until_ready(out)

    expected = stnkd_forward_ref(x, ref_params, k)
    assert out.shape == (B, k, k)
    np.testing.assert_allclose(np.asarray(out), np.asarray(expected), rtol=1e-1, atol=2e-1)
    print("KERNEL_OK")
</pallas_src>

<mosaic_0001>
module attributes {stable_mosaic.version = 11 : i64} {
  func.func @_stn_conv_pool_kernel(%arg0: i32, %arg1: i32, %arg2: memref<1x256x64xbf16, #tpu.memory_space<vmem>>, %arg3: memref<64x128xbf16, #tpu.memory_space<vmem>>, %arg4: memref<1x128xf32, #tpu.memory_space<vmem>>, %arg5: memref<128x128xbf16, #tpu.memory_space<vmem>>, %arg6: memref<1x128xf32, #tpu.memory_space<vmem>>, %arg7: memref<128x1024xbf16, #tpu.memory_space<vmem>>, %arg8: memref<1x1024xf32, #tpu.memory_space<vmem>>, %arg9: memref<1x1x1024xf32, #tpu.memory_space<vmem>>) attributes {dimension_semantics = [#tpu.dimension_semantics<parallel>, #tpu.dimension_semantics<arbitrary>], iteration_bounds = array<i64: 2, 1>, scalar_prefetch = 0 : i64, scratch_operands = 0 : i64, tpu.core_type = #tpu.core_type<tc>, window_params = [{transform_indices = @transform_0, window_bounds = array<i64: 1, 256, 64>}, {pipeline_mode = #tpu.pipeline_mode<synchronous>, transform_indices = @transform_1, window_bounds = array<i64: 64, 128>}, {pipeline_mode = #tpu.pipeline_mode<synchronous>, transform_indices = @transform_2, window_bounds = array<i64: 1, 128>}, {pipeline_mode = #tpu.pipeline_mode<synchronous>, transform_indices = @transform_3, window_bounds = array<i64: 128, 128>}, {pipeline_mode = #tpu.pipeline_mode<synchronous>, transform_indices = @transform_4, window_bounds = array<i64: 1, 128>}, {pipeline_mode = #tpu.pipeline_mode<synchronous>, transform_indices = @transform_5, window_bounds = array<i64: 128, 1024>}, {pipeline_mode = #tpu.pipeline_mode<synchronous>, transform_indices = @transform_6, window_bounds = array<i64: 1, 1024>}, {transform_indices = @transform_7, window_bounds = array<i64: 1, 1, 1024>}]} {
    %c0_i32 = arith.constant 0 : i32
    %0 = arith.cmpi eq, %arg1, %c0_i32 : i32
    %1 = arith.extui %0 : i1 to i32
    %c0_i32_0 = arith.constant 0 : i32
    %2 = arith.cmpi ne, %1, %c0_i32_0 : i32
    scf.if %2 {
      %cst_26 = arith.constant 0.000000e+00 : f32
      %33 = vector.broadcast %cst_26 : f32 to vector<1x1x1024xf32>
      %c0_27 = arith.constant 0 : index
      %c0_28 = arith.constant 0 : index
      %c0_29 = arith.constant 0 : index
      %34 = vector.load %arg9[%c0_27, %c0_28, %c0_29] : memref<1x1x1024xf32, #tpu.memory_space<vmem>>, vector<1x1x1024xf32>
      tpu.vector_store %arg9[%c0_27, %c0_28, %c0_29], %33 {strides = array<i32>} : memref<1x1x1024xf32, #tpu.memory_space<vmem>>, vector<1x1x1024xf32>,
    } else {
    }
    %c0 = arith.constant 0 : index
    %c0_1 = arith.constant 0 : index
    %c0_2 = arith.constant 0 : index
    %3 = vector.load %arg2[%c0, %c0_1, %c0_2] : memref<1x256x64xbf16, #tpu.memory_space<vmem>>, vector<1x256x64xbf16>
    %4 = vector.shape_cast %3 : vector<1x256x64xbf16> to vector<256x64xbf16>
    %c0_3 = arith.constant 0 : index
    %c0_4 = arith.constant 0 : index
    %5 = vector.load %arg3[%c0_3, %c0_4] : memref<64x128xbf16, #tpu.memory_space<vmem>>, vector<64x128xbf16>
    %cst = arith.constant dense<0.000000e+00> : vector<256x128xf32>
    %6 = tpu.matmul %4, %5, %cst {dimension_numbers = #tpu.dot_dimension_numbers<[1], [0], [0], [1], [0, 0, 1, 1], [], []>} : vector<256x64xbf16>, vector<64x128xbf16>, vector<256x128xf32> -> vector<256x128xf32>
    %c0_5 = arith.constant 0 : index
    %c0_6 = arith.constant 0 : index
    %7 = vector.load %arg4[%c0_5, %c0_6] : memref<1x128xf32, #tpu.memory_space<vmem>>, vector<1x128xf32>
    %8 = vector.broadcast %7 : vector<1x128xf32> to vector<256x128xf32>
    %9 = arith.addf %6, %8 : vector<256x128xf32>
    %cst_7 = arith.constant 0.000000e+00 : f32
    %10 = vector.broadcast %cst_7 : f32 to vector<256x128xf32>
    %11 = arith.maximumf %9, %10 : vector<256x128xf32>
    %12 = arith.truncf %11 : vector<256x128xf32> to vector<256x128xbf16>
    %c0_8 = arith.constant 0 : index
    %c0_9 = arith.constant 0 : index
    %13 = vector.load %arg5[%c0_8, %c0_9] : memref<128x128xbf16, #tpu.memory_space<vmem>>, vector<128x128xbf16>
    %cst_10 = arith.constant dense<0.000000e+00> : vector<256x128xf32>
    %14 = tpu.matmul %12, %13, %cst_10 {dimension_numbers = #tpu.dot_dimension_numbers<[1], [0], [0], [1], [0, 0, 1, 1], [], []>} : vector<256x128xbf16>, vector<128x128xbf16>, vector<256x128xf32> -> vector<256x128xf32>
    %c0_11 = arith.constant 0 : index
    %c0_12 = arith.constant 0 : index
    %15 = vector.load %arg6[%c0_11, %c0_12] : memref<1x128xf32, #tpu.memory_space<vmem>>, vector<1x128xf32>
    %16 = vector.broadcast %15 : vector<1x128xf32> to vector<256x128xf32>
    %17 = arith.addf %14, %16 : vector<256x128xf32>
    %cst_13 = arith.constant 0.000000e+00 : f32
    %18 = vector.broadcast %cst_13 : f32 to vector<256x128xf32>
    %19 = arith.maximumf %17, %18 : vector<256x128xf32>
    %20 = arith.truncf %19 : vector<256x128xf32> to vector<256x128xbf16>
    %c0_14 = arith.constant 0 : index
    %c0_15 = arith.constant 0 : index
    %21 = vector.load %arg7[%c0_14, %c0_15] : memref<128x1024xbf16, #tpu.memory_space<vmem>>, vector<128x1024xbf16>
    %cst_16 = arith.constant dense<0.000000e+00> : vector<256x1024xf32>
    %22 = tpu.matmul %20, %21, %cst_16 {dimension_numbers = #tpu.dot_dimension_numbers<[1], [0], [0], [1], [0, 0, 1, 1], [], []>} : vector<256x128xbf16>, vector<128x1024xbf16>, vector<256x1024xf32> -> vector<256x1024xf32>
    %cst_17 = arith.constant dense<0xFF800000> : vector<1024xf32>
    %23 = vector.multi_reduction <maximumf>, %22, %cst_17 [0] : vector<256x1024xf32> to vector<1024xf32>
    %24 = vector.shape_cast %23 : vector<1024xf32> to vector<1x1024xf32>
    %c0_18 = arith.constant 0 : index
    %c0_19 = arith.constant 0 : index
    %25 = vector.load %arg8[%c0_18, %c0_19] : memref<1x1024xf32, #tpu.memory_space<vmem>>, vector<1x1024xf32>
    %26 = arith.addf %24, %25 : vector<1x1024xf32>
    %c0_20 = arith.constant 0 : index
    %c0_21 = arith.constant 0 : index
    %c0_22 = arith.constant 0 : index
    %27 = vector.load %arg9[%c0_20, %c0_21, %c0_22] : memref<1x1x1024xf32, #tpu.memory_space<vmem>>, vector<1x1x1024xf32>
    %28 = vector.shape_cast %27 : vector<1x1x1024xf32> to vector<1x1024xf32>
    %29 = arith.maximumf %28, %26 : vector<1x1024xf32>
    %c0_23 = arith.constant 0 : index
    %c0_24 = arith.constant 0 : index
    %c0_25 = arith.constant 0 : index
    %30 = vector.load %arg9[%c0_23, %c0_24, %c0_25] : memref<1x1x1024xf32, #tpu.memory_space<vmem>>, vector<1x1x1024xf32>
    %31 = vector.shape_cast %30 : vector<1x1x1024xf32> to vector<1x1024xf32>
    %32 = vector.shape_cast %29 : vector<1x1024xf32> to vector<1x1x1024xf32>
    tpu.vector_store %arg9[%c0_23, %c0_24, %c0_25], %32 {strides = array<i32>} : memref<1x1x1024xf32, #tpu.memory_space<vmem>>, vector<1x1x1024xf32>,
    return
  }
  func.func @transform_0(%arg0: i32, %arg1: i32) -> (i32, i32, i32) {
    %c0_i32 = arith.constant 0 : i32
    %c0_i32_0 = arith.constant 0 : i32
    return %arg0, %arg1, %c0_i32 : i32, i32, i32
  }
  func.func @transform_1(%arg0: i32, %arg1: i32) -> (i32, i32) {
    %c0_i32 = arith.constant 0 : i32
    %c0_i32_0 = arith.constant 0 : i32
    %c0_i32_1 = arith.constant 0 : i32
    return %c0_i32, %c0_i32_0 : i32, i32
  }
  func.func @transform_2(%arg0: i32, %arg1: i32) -> (i32, i32) {
    %c0_i32 = arith.constant 0 : i32
    %c0_i32_0 = arith.constant 0 : i32
    %c0_i32_1 = arith.constant 0 : i32
    return %c0_i32, %c0_i32_0 : i32, i32
  }
  func.func @transform_3(%arg0: i32, %arg1: i32) -> (i32, i32) {
    %c0_i32 = arith.constant 0 : i32
    %c0_i32_0 = arith.constant 0 : i32
    %c0_i32_1 = arith.constant 0 : i32
    return %c0_i32, %c0_i32_0 : i32, i32
  }
  func.func @transform_4(%arg0: i32, %arg1: i32) -> (i32, i32) {
    %c0_i32 = arith.constant 0 : i32
    %c0_i32_0 = arith.constant 0 : i32
    %c0_i32_1 = arith.constant 0 : i32
    return %c0_i32, %c0_i32_0 : i32, i32
  }
  func.func @transform_5(%arg0: i32, %arg1: i32) -> (i32, i32) {
    %c0_i32 = arith.constant 0 : i32
    %c0_i32_0 = arith.constant 0 : i32
    %c0_i32_1 = arith.constant 0 : i32
    return %c0_i32, %c0_i32_0 : i32, i32
  }
  func.func @transform_6(%arg0: i32, %arg1: i32) -> (i32, i32) {
    %c0_i32 = arith.constant 0 : i32
    %c0_i32_0 = arith.constant 0 : i32
    %c0_i32_1 = arith.constant 0 : i32
    return %c0_i32, %c0_i32_0 : i32, i32
  }
  func.func @transform_7(%arg0: i32, %arg1: i32) -> (i32, i32, i32) {
    %c0_i32 = arith.constant 0 : i32
    %c0_i32_0 = arith.constant 0 : i32
    %c0_i32_1 = arith.constant 0 : i32
    return %arg0, %c0_i32, %c0_i32_0 : i32, i32, i32
  }
}

</mosaic_0001>

<llo_original>
// kernel: tpu_custom_call.1
$region0: #{tpu_custom_call.1}
  #allocation0 [shape = 'u32[]', space=smem, size = 0x4, offset = 0x4, fixed_abs, tag = 'smem constant byte address 0x4 - core index']
  #allocation1 [shape = 'u32[144,128]{1,0:T(1,128)}', space=vmem, size = 0x12000, scoped, tag = 'internal scratch']
  %s0 = inlined_call_operand.vmem [shape: bf16[2,256,64], index: 0, kind: input, shape index: {}]
  %s1 = inlined_call_operand.vmem [shape: bf16[64,128], index: 1, kind: input, shape index: {}]
  %s2 = inlined_call_operand.vmem [shape: f32[1,128], index: 2, kind: input, shape index: {}]
  %s3 = inlined_call_operand.vmem [shape: bf16[128,128], index: 3, kind: input, shape index: {}]
  %s4 = inlined_call_operand.vmem [shape: f32[1,128], index: 4, kind: input, shape index: {}]
  %s5 = inlined_call_operand.hbm [shape: bf16[128,1024], index: 5, kind: input, shape index: {}]
  %s6 = inlined_call_operand.vmem [shape: f32[1,1024], index: 6, kind: input, shape index: {}]
  %s7 = inlined_call_operand.hbm [shape: f32[2,1,1024], index: 7, kind: output, shape index: {}]
  %s8 = sld [smem:[#allocation0]]
  $region69: #{tpu_custom_call.1} parent=0
    _
  %s10 = ssub.s32 1, %s8
  %s11 = scalar_select 0, %s10, %s8
  $region1: #{tpu_custom_call.1} parent=0
    #allocation2 [shape = 'u8[262144]{0}', space=vmem, size = 0x40000, scoped, tag = 'input window, operand 5, single buffered']
    #allocation3 [shape = 's32[2]{0}', space=sflag, size = 0x8, scoped, tag = 'scoped memory for tpu_custom_call.1']
    #allocation4 [shape = 's32[2]{0}', space=sflag, size = 0x8, scoped, tag = 'scoped memory for tpu_custom_call.1']
    #allocation5 [shape = 'u8[8192]{0}', space=vmem, size = 0x2000, scoped, tag = 'output window, operand 0']
    %12 = vsyncpa [#allocation3], 0
    %13 = vsyncpa [#allocation4], 0
    %s14 = scalar_lea.sflag [#allocation4], 1
    %15 = vsyncpa %s14, 0
    loop: start=0, step=1, limit=4
    $region2: #{tpu_custom_call.1} parent=1 // loop_pre_header
      _
    $region3: #{tpu_custom_call.1} parent=1 // loop_header
      %s17 = sphi 0, %s21
      %p18 = scmp.ge.s32.totalorder %s17, 4
      %s24 = sphi 0, %s36
      %s25 = sphi 0, %s32
      %s26 = sphi 0, %s24
      %s27 = sphi 0, %s25
      %s28 = sphi 0, %s26
      %s29 = sphi 0, %s27
      %s41 = sphi 0, %s43
      %s44 = sphi 0, %s41
      %s45 = sphi 0, %s44
      %s61 = sphi 0, %s45
      %s65 = sphi 0, %s65
      %s67 = sphi 0, %s65
      %s68 = sphi 0, %s67
      %s82 = sphi 0, %s68
      %s86 = sphi 0, %s86
      %s88 = sphi 0, %s86
      %s89 = sphi 0, %s88
      %s103 = sphi 0, %s89
      %s107 = sphi 0, %s107
      %s109 = sphi 0, %s107
      %s110 = sphi 0, %s109
      %s124 = sphi 0, %s110
      %s128 = sphi 0, %s128
      %s130 = sphi 0, %s128
      %s131 = sphi 0, %s130
      %s145 = sphi 0, %s131
      %s149 = sphi 0, %s149
      %s151 = sphi 0, %s149
      %s152 = sphi 0, %s151
      %s166 = sphi 0, %s152
      %s170 = sphi 0, %s170
      %s172 = sphi 0, %s170
      %s173 = sphi 0, %s172
      %s187 = sphi 0, %s173
      %s193 = sphi 0, %s195
      %s196 = sphi 0, %s193
      %s197 = sphi 0, %s196
      %s213 = sphi 0, %s197
    $region4: #{tpu_custom_call.1} parent=1 // loop_header_branch
      %20 = sbr.rel (%p18) target = $region8
    $region5: #{tpu_custom_call.1} parent=1 // loop_body
      %s22 = ssub.s32 %s17, 1
      %s23 = ssub.s32 %s17, 2
      %s30 = sadd.s32 1, %s25
      %p31 = scmp.ge.s32.totalorder %s30, 1
      %s32 = scalar_select %p31, 0, %s30
      %s33 = sadd.s32 1, %s24
      %s34 = scalar_select %p31, %s33, %s24
      %p35 = scmp.ge.s32.totalorder %s34, 2
      %s36 = scalar_select %p35, 0, %s34
      %s37 = ssub.s32 %s24, %s36
      %s38 = ssub.s32 %s25, %s32
      %s39 = sor.u32 %s37, %s38
      %p40 = scmp.eq.s32.totalorder %s39, 0
      %s42 = sadd.s32 %s41, 1
      %s43 = scalar_select %p40, %s41, %s42
      %p46 = pneg %p40
      %p47 = scmp.eq.s32.totalorder %s17, 1
      %p48 = por %p46, %p47
      %p49 = scmp.ne.s32.totalorder %s41, %s44
      %p50 = scmp.eq.s32.totalorder %s17, 0
      %p51 = por %p49, %p50
      %p52 = scmp.ne.s32.totalorder %s41, %s44
      %p53 = scmp.eq.s32.totalorder %s22, 1
      %p54 = por %p52, %p53
      %p55 = scmp.ne.s32.totalorder %s44, %s45
      %p56 = scmp.eq.s32.totalorder %s22, 0
      %p57 = por %p55, %p56
      %p58 = scmp.ne.s32.totalorder %s44, %s45
      %p59 = scmp.eq.s32.totalorder %s23, 1
      %p60 = por %p58, %p59
      %p62 = scmp.ne.s32.totalorder %s45, %s61
      %p63 = scmp.eq.s32.totalorder %s23, 0
      %p64 = por %p62, %p63
      %s66 = sadd.s32 %s65, 1
      %p69 = scmp.eq.s32.totalorder %s17, 1
      %p70 = scmp.ne.s32.totalorder %s65, %s67
      %p71 = scmp.eq.s32.totalorder %s17, 0
      %p72 = por %p70, %p71
      %p73 = scmp.ne.s32.totalorder %s65, %s67
      %p74 = scmp.eq.s32.totalorder %s22, 1
      %p75 = por %p73, %p74
      %p76 = scmp.ne.s32.totalorder %s67, %s68
      %p77 = scmp.eq.s32.totalorder %s22, 0
      %p78 = por %p76, %p77
      %p79 = scmp.ne.s32.totalorder %s67, %s68
      %p80 = scmp.eq.s32.totalorder %s23, 1
      %p81 = por %p79, %p80
      %p83 = scmp.ne.s32.totalorder %s68, %s82
      %p84 = scmp.eq.s32.totalorder %s23, 0
      %p85 = por %p83, %p84
      %s87 = sadd.s32 %s86, 1
      %p90 = scmp.eq.s32.totalorder %s17, 1
      %p91 = scmp.ne.s32.totalorder %s86, %s88
      %p92 = scmp.eq.s32.totalorder %s17, 0
      %p93 = por %p91, %p92
      %p94 = scmp.ne.s32.totalorder %s86, %s88
      %p95 = scmp.eq.s32.totalorder %s22, 1
      %p96 = por %p94, %p95
      %p97 = scmp.ne.s32.totalorder %s88, %s89
      %p98 = scmp.eq.s32.totalorder %s22, 0
      %p99 = por %p97, %p98
      %p100 = scmp.ne.s32.totalorder %s88, %s89
      %p101 = scmp.eq.s32.totalorder %s23, 1
      %p102 = por %p100, %p101
      %p104 = scmp.ne.s32.totalorder %s89, %s103
      %p105 = scmp.eq.s32.totalorder %s23, 0
      %p106 = por %p104, %p105
      %s108 = sadd.s32 %s107, 1
      %p111 = scmp.eq.s32.totalorder %s17, 1
      %p112 = scmp.ne.s32.totalorder %s107, %s109
      %p113 = scmp.eq.s32.totalorder %s17, 0
      %p114 = por %p112, %p113
      %p115 = scmp.ne.s32.totalorder %s107, %s109
      %p116 = scmp.eq.s32.totalorder %s22, 1
      %p117 = por %p115, %p116
      %p118 = scmp.ne.s32.totalorder %s109, %s110
      %p119 = scmp.eq.s32.totalorder %s22, 0
      %p120 = por %p118, %p119
      %p121 = scmp.ne.s32.totalorder %s109, %s110
      %p122 = scmp.eq.s32.totalorder %s23, 1
      %p123 = por %p121, %p122
      %p125 = scmp.ne.s32.totalorder %s110, %s124
      %p126 = scmp.eq.s32.totalorder %s23, 0
      %p127 = por %p125, %p126
      %s129 = sadd.s32 %s128, 1
      %p132 = scmp.eq.s32.totalorder %s17, 1
      %p133 = scmp.ne.s32.totalorder %s128, %s130
      %p134 = scmp.eq.s32.totalorder %s17, 0
      %p135 = por %p133, %p134
      %p136 = scmp.ne.s32.totalorder %s128, %s130
      %p137 = scmp.eq.s32.totalorder %s22, 1
      %p138 = por %p136, %p137
      %p139 = scmp.ne.s32.totalorder %s130, %s131
      %p140 = scmp.eq.s32.totalorder %s22, 0
      %p141 = por %p139, %p140
      %p142 = scmp.ne.s32.totalorder %s130, %s131
      %p143 = scmp.eq.s32.totalorder %s23, 1
      %p144 = por %p142, %p143
      %p146 = scmp.ne.s32.totalorder %s131, %s145
      %p147 = scmp.eq.s32.totalorder %s23, 0
      %p148 = por %p146, %p147
      %s150 = sadd.s32 %s149, 1
      %p153 = scmp.eq.s32.totalorder %s17, 1
      %p154 = scmp.ne.s32.totalorder %s149, %s151
      %p155 = scmp.eq.s32.totalorder %s17, 0
      %p156 = por %p154, %p155
      %p157 = scmp.ne.s32.totalorder %s149, %s151
      %p158 = scmp.eq.s32.totalorder %s22, 1
      %p159 = por %p157, %p158
      %p160 = scmp.ne.s32.totalorder %s151, %s152
      %p161 = scmp.eq.s32.totalorder %s22, 0
      %p162 = por %p160, %p161
      %p163 = scmp.ne.s32.totalorder %s151, %s152
      %p164 = scmp.eq.s32.totalorder %s23, 1
      %p165 = por %p163, %p164
      %p167 = scmp.ne.s32.totalorder %s152, %s166
      %p168 = scmp.eq.s32.totalorder %s23, 0
      %p169 = por %p167, %p168
      %s171 = sadd.s32 %s170, 1
      %p174 = scmp.eq.s32.totalorder %s17, 1
      %p175 = scmp.ne.s32.totalorder %s170, %s172
      %p176 = scmp.eq.s32.totalorder %s17, 0
      %p177 = por %p175, %p176
      %p178 = scmp.ne.s32.totalorder %s170, %s172
      %p179 = scmp.eq.s32.totalorder %s22, 1
      %p180 = por %p178, %p179
      %p181 = scmp.ne.s32.totalorder %s172, %s173
      %p182 = scmp.eq.s32.totalorder %s22, 0
      %p183 = por %p181, %p182
      %p184 = scmp.ne.s32.totalorder %s172, %s173
      %p185 = scmp.eq.s32.totalorder %s23, 1
      %p186 = por %p184, %p185
      %p188 = scmp.ne.s32.totalorder %s173, %s187
      %p189 = scmp.eq.s32.totalorder %s23, 0
      %p190 = por %p188, %p189
      %s191 = ssub.s32 %s24, %s36
      %p192 = scmp.eq.s32.totalorder %s191, 0
      %s194 = sadd.s32 %s193, 1
      %s195 = scalar_select %p192, %s193, %s194
      %p198 = pneg %p192
      %p199 = scmp.eq.s32.totalorder %s17, 1
      %p200 = por %p198, %p199
      %p201 = scmp.ne.s32.totalorder %s193, %s196
      %p202 = scmp.eq.s32.totalorder %s17, 0
      %p203 = por %p201, %p202
      %p204 = scmp.ne.s32.totalorder %s193, %s196
      %p205 = scmp.eq.s32.totalorder %s22, 1
      %p206 = por %p204, %p205
      %p207 = scmp.ne.s32.totalorder %s196, %s197
      %p208 = scmp.eq.s32.totalorder %s22, 0
      %p209 = por %p207, %p208
      %p210 = scmp.ne.s32.totalorder %s196, %s197
      %p211 = scmp.eq.s32.totalorder %s23, 1
      %p212 = por %p210, %p211
      %p214 = scmp.ne.s32.totalorder %s197, %s213
      %p215 = scmp.eq.s32.totalorder %s23, 0
      %p216 = por %p214, %p215
      %p217 = scmp.le.s32.totalorder 1, %s17
      %p218 = scmp.lt.s32.totalorder %s17, 3
      %p219 = pnand %p217, %p218
      %p220 = pneg %p219
      // Predicated region
      $region9: #{tpu_custom_call.1} parent=5 // pred_check
        _
      $region10: #{tpu_custom_call.1} parent=5 // pred_check_branch
        %222 = sbr.rel (%p219) target = $region12
      $region11: #{tpu_custom_call.1} parent=5 // pred_region
        %s223 = ssub.s32 %s17, 1
        // Predicated region
        $region13: #{tpu_custom_call.1} parent=11 // pred_check
          %p224 = pneg %p78
        $region14: #{tpu_custom_call.1} parent=11 // pred_check_branch
          %226 = sbr.rel (%p224) target = $region16
        $region15: #{tpu_custom_call.1} parent=11 // pred_region
          _
        $region16: #{tpu_custom_call.1} parent=11 // pred_fallthru
          _
        // Predicated region
        $region17: #{tpu_custom_call.1} parent=11 // pred_check
          %p227 = pneg %p99
        $region18: #{tpu_custom_call.1} parent=11 // pred_check_branch
          %229 = sbr.rel (%p227) target = $region20
        $region19: #{tpu_custom_call.1} parent=11 // pred_region
          _
        $region20: #{tpu_custom_call.1} parent=11 // pred_fallthru
          _
        // Predicated region
        $region21: #{tpu_custom_call.1} parent=11 // pred_check
          %p230 = pneg %p120
        $region22: #{tpu_custom_call.1} parent=11 // pred_check_branch
          %232 = sbr.rel (%p230) target = $region24
        $region23: #{tpu_custom_call.1} parent=11 // pred_region
          _
        $region24: #{tpu_custom_call.1} parent=11 // pred_fallthru
          _
        // Predicated region
        $region25: #{tpu_custom_call.1} parent=11 // pred_check
          %p233 = pneg %p141
        $region26: #{tpu_custom_call.1} parent=11 // pred_check_branch
          %235 = sbr.rel (%p233) target = $region28
        $region27: #{tpu_custom_call.1} parent=11 // pred_region
          _
        $region28: #{tpu_custom_call.1} parent=11 // pred_fallthru
          _
        // Predicated region
        $region29: #{tpu_custom_call.1} parent=11 // pred_check
          %p236 = pneg %p162
        $region30: #{tpu_custom_call.1} parent=11 // pred_check_branch
          %238 = sbr.rel (%p236) target = $region32
        $region31: #{tpu_custom_call.1} parent=11 // pred_region
          %s240 = ssub.s32 8192, 8192
          %241 = vsyncadd [#allocation3], %s240
          %s242 = sshll.u32 [#allocation2], 4
          %s243 = int_to_ptr.vmem [resolvable:$true] %s242
          %248 = dma.hbm_to_vmem [thread:$0]  %s5, 8192, %s243, [#allocation3], 512, 512, 32
        $region32: #{tpu_custom_call.1} parent=11 // pred_fallthru
          _
        // Predicated region
        $region33: #{tpu_custom_call.1} parent=11 // pred_check
          %p249 = pneg %p183
        $region34: #{tpu_custom_call.1} parent=11 // pred_check_branch
          %251 = sbr.rel (%p249) target = $region36
        $region35: #{tpu_custom_call.1} parent=11 // pred_region
          _
        $region36: #{tpu_custom_call.1} parent=11 // pred_fallthru
          _
      $region12: #{tpu_custom_call.1} parent=5 // pred_fallthru
        _
      %p252 = scmp.lt.s32.totalorder %s17, 2
      // Predicated region
      $region37: #{tpu_custom_call.1} parent=5 // pred_check
        %p253 = pneg %p252
      $region38: #{tpu_custom_call.1} parent=5 // pred_check_branch
        %255 = sbr.rel (%p253) target = $region40
      $region39: #{tpu_custom_call.1} parent=5 // pred_region
        // Predicated region
        $region41: #{tpu_custom_call.1} parent=39 // pred_check
          %p256 = pneg %p51
        $region42: #{tpu_custom_call.1} parent=39 // pred_check_branch
          %258 = sbr.rel (%p256) target = $region44
        $region43: #{tpu_custom_call.1} parent=39 // pred_region
          %s259 = smul.u32 32, %s25
          %p260 = scmp.lt.s32.totalorder %s24, 1
          %s261 = scalar_select %p260, %s24, 1
          %p262 = scmp.lt.s32.totalorder %s259, 31
          %s263 = scalar_select %p262, %s259, 31
          %s264 = smul.addr %s261, 32
          %s265 = sadd.s32 %s263, %s264
          %s266 = smul.addr %s265, 4
          %s267 = scalar_lea.vmem %s0, %s266
          %s268 = smul.u32 32, %s25
        $region44: #{tpu_custom_call.1} parent=39 // pred_fallthru
          _
      $region40: #{tpu_custom_call.1} parent=5 // pred_fallthru
        _
      %p269 = scmp.le.s32.totalorder 1, %s17
      %p270 = scmp.lt.s32.totalorder %s17, 3
      %p271 = pnand %p269, %p270
      %p272 = pneg %p271
      // Predicated region
      $region45: #{tpu_custom_call.1} parent=5 // pred_check
        _
      $region46: #{tpu_custom_call.1} parent=5 // pred_check_branch
        %274 = sbr.rel (%p271) target = $region48
      $region47: #{tpu_custom_call.1} parent=5 // pred_region
        %s275 = ssub.s32 %s17, 1
        // Predicated region
        $region49: #{tpu_custom_call.1} parent=47 // pred_check
          %p276 = pneg %p162
        $region50: #{tpu_custom_call.1} parent=47 // pred_check_branch
          %278 = sbr.rel (%p276) target = $region52
        $region51: #{tpu_custom_call.1} parent=47 // pred_region
          %279 = dma.done [#allocation3], 8192
        $region52: #{tpu_custom_call.1} parent=47 // pred_fallthru
          _
        %s280 = smul.u32 32, %s27
        %p281 = scmp.lt.s32.totalorder %s26, 1
        %s282 = scalar_select %p281, %s26, 1
        %p283 = scmp.lt.s32.totalorder %s280, 31
        %s284 = scalar_select %p283, %s280, 31
        %s285 = smul.addr %s282, 32
        %s286 = sadd.s32 %s284, %s285
        %s287 = smul.addr %s286, 4
        %s288 = scalar_lea.vmem %s0, %s287
        %p289 = pneg %p57
        %p290 = pneg %p54
        %p291 = pneg %p78
        %p292 = pneg %p75
        %p293 = pneg %p99
        %p294 = pneg %p96
        %p295 = pneg %p120
        %p296 = pneg %p117
        %p297 = pneg %p141
        %p298 = pneg %p138
        %p299 = pneg %p162
        %p300 = pneg %p159
        %p301 = pneg %p183
        %p302 = pneg %p180
        %p303 = pneg %p209
        %p304 = pneg %p206
        %s305 = sand.u32 %s196, 1
        %s306 = scalar_lea.sflag [#allocation4], %s305
        %s307 = sand.u32 %s196, 1
        %s308 = smul.addr %s307, 8
        %s309 = scalar_lea.vmem [#allocation5], %s308
        %s310 = smul.u32 32, %s27
        %p311 = scmp.lt.s32.totalorder %s26, 1
        %s312 = scalar_select %p311, %s26, 1
        %p313 = scmp.lt.s32.totalorder %s310, 31
        %s314 = scalar_select %p313, %s310, 31
        %s315 = smul.addr %s312, 32
        %s316 = sadd.s32 %s314, %s315
        %s317 = smul.addr %s316, 4
        %s318 = scalar_lea.vmem %s0, %s317
        %s319 = smul.u32 32, %s27
        %p321 = scmp.eq.s32.totalorder %s27, 0
        // Predicated region
        $region53: #{tpu_custom_call.1} parent=47 // pred_check
          %p322 = pneg %p321
        $region54: #{tpu_custom_call.1} parent=47 // pred_check_branch
          %324 = sbr.rel (%p322) target = $region56
        $region55: #{tpu_custom_call.1} parent=47 // pred_region
          %325 = vst [vmem:[%s309] sm:$0xff] 0.0
        $region56: #{tpu_custom_call.1} parent=47 // pred_fallthru
          _
        %v326 = vld [vmem:[%s318] sm:$0xf]
        %v327 = vld [vmem:[%s318 + $0x4] sm:$0xf]
        %v328 = vld [vmem:[%s318 + $0x8] sm:$0xf]
        %v329 = vld [vmem:[%s318 + $0xc] sm:$0xf]
        %v330 = vld [vmem:[%s318 + $0x10] sm:$0xf]
        %v331 = vld [vmem:[%s318 + $0x14] sm:$0xf]
        %v332 = vld [vmem:[%s318 + $0x18] sm:$0xf]
        %v333 = vld [vmem:[%s318 + $0x1c] sm:$0xf]
        %v334 = vld [vmem:[%s318 + $0x20] sm:$0xf]
        %v335 = vld [vmem:[%s318 + $0x24] sm:$0xf]
        %v336 = vld [vmem:[%s318 + $0x28] sm:$0xf]
        %v337 = vld [vmem:[%s318 + $0x2c] sm:$0xf]
        %v338 = vld [vmem:[%s318 + $0x30] sm:$0xf]
        %v339 = vld [vmem:[%s318 + $0x34] sm:$0xf]
        %v340 = vld [vmem:[%s318 + $0x38] sm:$0xf]
        %v341 = vld [vmem:[%s318 + $0x3c] sm:$0xf]
        %v342 = vld [vmem:[%s318 + $0x40] sm:$0xf]
        %v343 = vld [vmem:[%s318 + $0x44] sm:$0xf]
        %v344 = vld [vmem:[%s318 + $0x48] sm:$0xf]
        %v345 = vld [vmem:[%s318 + $0x4c] sm:$0xf]
        %v346 = vld [vmem:[%s318 + $0x50] sm:$0xf]
        %v347 = vld [vmem:[%s318 + $0x54] sm:$0xf]
        %v348 = vld [vmem:[%s318 + $0x58] sm:$0xf]
        %v349 = vld [vmem:[%s318 + $0x5c] sm:$0xf]
        %v350 = vld [vmem:[%s318 + $0x60] sm:$0xf]
        %v351 = vld [vmem:[%s318 + $0x64] sm:$0xf]
        %v352 = vld [vmem:[%s318 + $0x68] sm:$0xf]
        %v353 = vld [vmem:[%s318 + $0x6c] sm:$0xf]
        %v354 = vld [vmem:[%s318 + $0x70] sm:$0xf]
        %v355 = vld [vmem:[%s318 + $0x74] sm:$0xf]
        %v356 = vld [vmem:[%s318 + $0x78] sm:$0xf]
        %v357 = vld [vmem:[%s318 + $0x7c] sm:$0xf]
        %v358 = vld [vmem:[%s1] sm:$0xf]
        %v359 = vld [vmem:[%s1 + $0x4] sm:$0xf]
        %v360 = vld [vmem:[%s1 + $0x8] sm:$0xf]
        %v361 = vld [vmem:[%s1 + $0xc] sm:$0xf]
        %v362 = vld [vmem:[%s1 + $0x10] sm:$0xf]
        %v363 = vld [vmem:[%s1 + $0x14] sm:$0xf]
        %v364 = vld [vmem:[%s1 + $0x18] sm:$0xf]
        %v365 = vld [vmem:[%s1 + $0x1c] sm:$0xf]
        %v366 = vld [vmem:[%s2] sm:$0x1]
        %v368 = vlaneseq
        %v369 = vshrl.u32 %v368, 7
        %v370 = vsub.s32 0, %v369
        %v371 = vrot.slane %v366, %v370
        %v405 = vunpack.c.l.b16 %v326
        %v406 = vunpack.c.l.b16 %v327
        %v407 = vunpack.c.l.b16 %v328
        %v408 = vunpack.c.l.b16 %v329
        %v409 = vunpack.c.l.b16 %v330
        %v410 = vunpack.c.l.b16 %v331
        %v411 = vunpack.c.l.b16 %v332
        %v412 = vunpack.c.l.b16 %v333
        %v413 = vunpack.c.l.b16 %v334
        %v414 = vunpack.c.l.b16 %v335
        %v415 = vunpack.c.l.b16 %v336
        %v416 = vunpack.c.l.b16 %v337
        %v417 = vunpack.c.l.b16 %v338
        %v418 = vunpack.c.l.b16 %v339
        %v419 = vunpack.c.l.b16 %v340
        %v420 = vunpack.c.l.b16 %v341
        %v421 = vunpack.c.l.b16 %v342
        %v422 = vunpack.c.l.b16 %v343
        %v423 = vunpack.c.l.b16 %v344
        %v424 = vunpack.c.l.b16 %v345
        %v425 = vunpack.c.l.b16 %v346
        %v426 = vunpack.c.l.b16 %v347
        %v427 = vunpack.c.l.b16 %v348
        %v428 = vunpack.c.l.b16 %v349
        %v429 = vunpack.c.l.b16 %v350
        %v430 = vunpack.c.l.b16 %v351
        %v431 = vunpack.c.l.b16 %v352
        %v432 = vunpack.c.l.b16 %v353
        %v433 = vunpack.c.l.b16 %v354
        %v434 = vunpack.c.l.b16 %v355
        %v435 = vunpack.c.l.b16 %v356
        %v436 = vunpack.c.l.b16 %v357
        %v437 = vpack.c.b16 %v406, %v405
        %v438 = vpack.c.b16 %v408, %v407
        %v439 = vpack.c.b16 %v410, %v409
        %v440 = vpack.c.b16 %v412, %v411
        %v441 = vpack.c.b16 %v414, %v413
        %v442 = vpack.c.b16 %v416, %v415
        %v443 = vpack.c.b16 %v418, %v417
        %v444 = vpack.c.b16 %v420, %v419
        %v445 = vpack.c.b16 %v422, %v421
        %v446 = vpack.c.b16 %v424, %v423
        %v447 = vpack.c.b16 %v426, %v425
        %v448 = vpack.c.b16 %v428, %v427
        %v449 = vpack.c.b16 %v430, %v429
        %v450 = vpack.c.b16 %v432, %v431
        %v451 = vpack.c.b16 %v434, %v433
        %v452 = vpack.c.b16 %v436, %v435
        %v461 = vunpack.c.l.b16 %v358
        %v462 = vunpack.c.l.b16 %v359
        %v463 = vunpack.c.l.b16 %v360
        %v464 = vunpack.c.l.b16 %v361
        %v465 = vunpack.c.l.b16 %v362
        %v466 = vunpack.c.l.b16 %v363
        %v467 = vunpack.c.l.b16 %v364
        %v468 = vunpack.c.l.b16 %v365
        %v469 = vpack.c.b16 %v462, %v461
        %v470 = vpack.c.b16 %v464, %v463
        %v471 = vpack.c.b16 %v466, %v465
        %v472 = vpack.c.b16 %v468, %v467
        %vm477 = vcmask 523264
        %v479 = vsel %vm477, %v437, 0
        %v482 = vsel %vm477, %v438, 0
        %v485 = vsel %vm477, %v439, 0
        %v488 = vsel %vm477, %v440, 0
        %v491 = vsel %vm477, %v441, 0
        %v494 = vsel %vm477, %v442, 0
        %v497 = vsel %vm477, %v443, 0
        %v500 = vsel %vm477, %v444, 0
        %v503 = vsel %vm477, %v445, 0
        %v506 = vsel %vm477, %v446, 0
        %v509 = vsel %vm477, %v447, 0
        %v512 = vsel %vm477, %v448, 0
        %v515 = vsel %vm477, %v449, 0
        %v518 = vsel %vm477, %v450, 0
        %v521 = vsel %vm477, %v451, 0
        %v524 = vsel %vm477, %v452, 0
        %526 = vmatprep.subr.bf16.mxu0 0
        %527 = vmatpush1.bf16.msra.mxu0 0
        %528 = vmatprep.subr.bf16.mxu0 0
        %529 = vmatpush1.bf16.msra.mxu0 0
        %530 = vmatprep.subr.bf16.mxu0 0
        %531 = vmatpush1.bf16.msra.mxu0 0
        %532 = vmatprep.subr.bf16.mxu0 0
        %533 = vmatpush1.bf16.msra.mxu0 0
        %534 = vmatprep.subr.bf16.mxu0 0
        %535 = vmatpush1.bf16.msra.mxu0 %v472
        %536 = vmatprep.subr.bf16.mxu0 0
        %537 = vmatpush1.bf16.msra.mxu0 %v471
        %538 = vmatprep.subr.bf16.mxu0 0
        %539 = vmatpush1.bf16.msra.mxu0 %v470
        %540 = vmatprep.subr.bf16.mxu0 0
        %541 = vmatpush1.bf16.msra.mxu0 %v469
        %542 = vmatprep.subr.bf16.mxu0 0
        %543 = vmatpush2.bf16.msra.mxu0 0
        %544 = vmatprep.subr.bf16.mxu0 0
        %545 = vmatpush2.bf16.msra.mxu0 0
        %546 = vmatprep.subr.bf16.mxu0 0
        %547 = vmatpush2.bf16.msra.mxu0 0
        %548 = vmatprep.subr.bf16.mxu0 0
        %549 = vmatpush2.bf16.msra.mxu0 0
        %550 = vmatprep.subr.bf16.mxu0 0
        %551 = vmatpush2.bf16.msra.mxu0 0
        %552 = vmatprep.subr.bf16.mxu0 0
        %553 = vmatpush2.bf16.msra.mxu0 0
        %554 = vmatprep.subr.bf16.mxu0 0
        %555 = vmatpush2.bf16.msra.mxu0 0
        %556 = vmatprep.subr.bf16.mxu0 0
        %557 = vmatpush2.bf16.msra.mxu0 0
        %558 = vmatprep.mubr.bf16.mxu0 0
        %559 = vmatmul.mubr.bf16.gmra.mxu0 %v479
        %v560 = vpop.f32.mrf.mxu0
        %v561 = vadd.f32 %v371, %v560
        %v562 = vpop.f32.mrf.mxu0
        %v563 = vpop.f32.mrf.mxu0
        %v564 = vadd.f32 %v371, %v563
        %v565 = vpop.f32.mrf.mxu0
        %566 = vmatprep.mubr.bf16.mxu0 0
        %567 = vmatmul.mubr.bf16.gmra.mxu0 %v482
        %v568 = vpop.f32.mrf.mxu0
        %v569 = vadd.f32 %v371, %v568
        %v570 = vpop.f32.mrf.mxu0
        %v571 = vpop.f32.mrf.mxu0
        %v572 = vadd.f32 %v371, %v571
        %v573 = vpop.f32.mrf.mxu0
        %574 = vmatprep.mubr.bf16.mxu0 0
        %575 = vmatmul.mubr.bf16.gmra.mxu0 %v485
        %v576 = vpop.f32.mrf.mxu0
        %v577 = vadd.f32 %v371, %v576
        %v578 = vpop.f32.mrf.mxu0
        %v579 = vpop.f32.mrf.mxu0
        %v580 = vadd.f32 %v371, %v579
        %v581 = vpop.f32.mrf.mxu0
        %582 = vmatprep.mubr.bf16.mxu0 0
        %583 = vmatmul.mubr.bf16.gmra.mxu0 %v488
        %v584 = vpop.f32.mrf.mxu0
        %v585 = vadd.f32 %v371, %v584
        %v586 = vpop.f32.mrf.mxu0
        %v587 = vpop.f32.mrf.mxu0
        %v588 = vadd.f32 %v371, %v587
        %v589 = vpop.f32.mrf.mxu0
        %590 = vmatprep.mubr.bf16.mxu0 0
        %591 = vmatmul.mubr.bf16.gmra.mxu0 %v491
        %v592 = vpop.f32.mrf.mxu0
        %v593 = vadd.f32 %v371, %v592
        %v594 = vpop.f32.mrf.mxu0
        %v595 = vpop.f32.mrf.mxu0
        %v596 = vadd.f32 %v371, %v595
        %v597 = vpop.f32.mrf.mxu0
        %598 = vmatprep.mubr.bf16.mxu0 0
        %599 = vmatmul.mubr.bf16.gmra.mxu0 %v494
        %v600 = vpop.f32.mrf.mxu0
        %v601 = vadd.f32 %v371, %v600
        %v602 = vpop.f32.mrf.mxu0
        %v603 = vpop.f32.mrf.mxu0
        %v604 = vadd.f32 %v371, %v603
        %v605 = vpop.f32.mrf.mxu0
        %606 = vmatprep.mubr.bf16.mxu0 0
        %607 = vmatmul.mubr.bf16.gmra.mxu0 %v497
        %v608 = vpop.f32.mrf.mxu0
        %v609 = vadd.f32 %v371, %v608
        %v610 = vpop.f32.mrf.mxu0
        %v611 = vpop.f32.mrf.mxu0
        %v612 = vadd.f32 %v371, %v611
        %v613 = vpop.f32.mrf.mxu0
        %614 = vmatprep.mubr.bf16.mxu0 0
        %615 = vmatmul.mubr.bf16.gmra.mxu0 %v500
        %v616 = vpop.f32.mrf.mxu0
        %v617 = vadd.f32 %v371, %v616
        %v618 = vpop.f32.mrf.mxu0
        %v619 = vpop.f32.mrf.mxu0
        %v620 = vadd.f32 %v371, %v619
        %v621 = vpop.f32.mrf.mxu0
        %622 = vmatprep.mubr.bf16.mxu0 0
        %623 = vmatmul.mubr.bf16.gmra.mxu0 %v503
        %v624 = vpop.f32.mrf.mxu0
        %v625 = vadd.f32 %v371, %v624
        %v626 = vpop.f32.mrf.mxu0
        %v627 = vpop.f32.mrf.mxu0
        %v628 = vadd.f32 %v371, %v627
        %v629 = vpop.f32.mrf.mxu0
        %630 = vmatprep.mubr.bf16.mxu0 0
        %631 = vmatmul.mubr.bf16.gmra.mxu0 %v506
        %v632 = vpop.f32.mrf.mxu0
        %v633 = vadd.f32 %v371, %v632
        %v634 = vpop.f32.mrf.mxu0
        %v635 = vpop.f32.mrf.mxu0
        %v636 = vadd.f32 %v371, %v635
        %v637 = vpop.f32.mrf.mxu0
        %638 = vmatprep.mubr.bf16.mxu0 0
        %639 = vmatmul.mubr.bf16.gmra.mxu0 %v509
        %v640 = vpop.f32.mrf.mxu0
        %v641 = vadd.f32 %v371, %v640
        %v642 = vpop.f32.mrf.mxu0
        %v643 = vpop.f32.mrf.mxu0
        %v644 = vadd.f32 %v371, %v643
        %v645 = vpop.f32.mrf.mxu0
        %646 = vmatprep.mubr.bf16.mxu0 0
        %647 = vmatmul.mubr.bf16.gmra.mxu0 %v512
        %v648 = vpop.f32.mrf.mxu0
        %v649 = vadd.f32 %v371, %v648
        %v650 = vpop.f32.mrf.mxu0
        %v651 = vpop.f32.mrf.mxu0
        %v652 = vadd.f32 %v371, %v651
        %v653 = vpop.f32.mrf.mxu0
        %654 = vmatprep.mubr.bf16.mxu0 0
        %655 = vmatmul.mubr.bf16.gmra.mxu0 %v515
        %v656 = vpop.f32.mrf.mxu0
        %v657 = vadd.f32 %v371, %v656
        %v658 = vpop.f32.mrf.mxu0
        %v659 = vpop.f32.mrf.mxu0
        %v660 = vadd.f32 %v371, %v659
        %v661 = vpop.f32.mrf.mxu0
        %662 = vmatprep.mubr.bf16.mxu0 0
        %663 = vmatmul.mubr.bf16.gmra.mxu0 %v518
        %v664 = vpop.f32.mrf.mxu0
        %v665 = vadd.f32 %v371, %v664
        %v666 = vpop.f32.mrf.mxu0
        %v667 = vpop.f32.mrf.mxu0
        %v668 = vadd.f32 %v371, %v667
        %v669 = vpop.f32.mrf.mxu0
        %670 = vmatprep.mubr.bf16.mxu0 0
        %671 = vmatmul.mubr.bf16.gmra.mxu0 %v521
        %v672 = vpop.f32.mrf.mxu0
        %v673 = vadd.f32 %v371, %v672
        %v674 = vpop.f32.mrf.mxu0
        %v675 = vpop.f32.mrf.mxu0
        %v676 = vadd.f32 %v371, %v675
        %v677 = vpop.f32.mrf.mxu0
        %678 = vmatprep.mubr.bf16.mxu0 0
        %679 = vmatmul.mubr.bf16.gmra.mxu0 %v524
        %v680 = vpop.f32.mrf.mxu0
        %v681 = vadd.f32 %v371, %v680
        %v682 = vpop.f32.mrf.mxu0
        %v683 = vpop.f32.mrf.mxu0
        %v684 = vadd.f32 %v371, %v683
        %v685 = vpop.f32.mrf.mxu0
        %686 = vdwg.mxu0
        %v687 = vmax.f32 %v561, 0.0
        %v688 = vmax.f32 %v564, 0.0
        %v689 = vmax.f32 %v569, 0.0
        %v690 = vmax.f32 %v572, 0.0
        %v691 = vmax.f32 %v577, 0.0
        %v692 = vmax.f32 %v580, 0.0
        %v693 = vmax.f32 %v585, 0.0
        %v694 = vmax.f32 %v588, 0.0
        %v695 = vmax.f32 %v593, 0.0
        %v696 = vmax.f32 %v596, 0.0
        %v697 = vmax.f32 %v601, 0.0
        %v698 = vmax.f32 %v604, 0.0
        %v699 = vmax.f32 %v609, 0.0
        %v700 = vmax.f32 %v612, 0.0
        %v701 = vmax.f32 %v617, 0.0
        %v702 = vmax.f32 %v620, 0.0
        %v703 = vmax.f32 %v625, 0.0
        %v704 = vmax.f32 %v628, 0.0
        %v705 = vmax.f32 %v633, 0.0
        %v706 = vmax.f32 %v636, 0.0
        %v707 = vmax.f32 %v641, 0.0
        %v708 = vmax.f32 %v644, 0.0
        %v709 = vmax.f32 %v649, 0.0
        %v710 = vmax.f32 %v652, 0.0
        %v711 = vmax.f32 %v657, 0.0
        %v712 = vmax.f32 %v660, 0.0
        %v713 = vmax.f32 %v665, 0.0
        %v714 = vmax.f32 %v668, 0.0
        %v715 = vmax.f32 %v673, 0.0
        %v716 = vmax.f32 %v676, 0.0
        %v717 = vmax.f32 %v681, 0.0
        %v718 = vmax.f32 %v684, 0.0
        %v719 = vpack.c.bf16 %v688, %v687
        %v720 = vpack.c.bf16 %v690, %v689
        %v721 = vpack.c.bf16 %v692, %v691
        %v722 = vpack.c.bf16 %v694, %v693
        %v723 = vpack.c.bf16 %v696, %v695
        %v724 = vpack.c.bf16 %v698, %v697
        %v725 = vpack.c.bf16 %v700, %v699
        %v726 = vpack.c.bf16 %v702, %v701
        %v727 = vpack.c.bf16 %v704, %v703
        %v728 = vpack.c.bf16 %v706, %v705
        %v729 = vpack.c.bf16 %v708, %v707
        %v730 = vpack.c.bf16 %v710, %v709
        %v731 = vpack.c.bf16 %v712, %v711
        %v732 = vpack.c.bf16 %v714, %v713
        %v733 = vpack.c.bf16 %v716, %v715
        %v734 = vpack.c.bf16 %v718, %v717
        %v735 = vld [vmem:[%s3] sm:$0xf]
        %v736 = vld [vmem:[%s3 + $0x4] sm:$0xf]
        %v737 = vld [vmem:[%s3 + $0x8] sm:$0xf]
        %v738 = vld [vmem:[%s3 + $0xc] sm:$0xf]
        %v739 = vld [vmem:[%s3 + $0x10] sm:$0xf]
        %v740 = vld [vmem:[%s3 + $0x14] sm:$0xf]
        %v741 = vld [vmem:[%s3 + $0x18] sm:$0xf]
        %v742 = vld [vmem:[%s3 + $0x1c] sm:$0xf]
        %v743 = vld [vmem:[%s3 + $0x20] sm:$0xf]
        %v744 = vld [vmem:[%s3 + $0x24] sm:$0xf]
        %v745 = vld [vmem:[%s3 + $0x28] sm:$0xf]
        %v746 = vld [vmem:[%s3 + $0x2c] sm:$0xf]
        %v747 = vld [vmem:[%s3 + $0x30] sm:$0xf]
        %v748 = vld [vmem:[%s3 + $0x34] sm:$0xf]
        %v749 = vld [vmem:[%s3 + $0x38] sm:$0xf]
        %v750 = vld [vmem:[%s3 + $0x3c] sm:$0xf]
        %v751 = vld [vmem:[%s4] sm:$0x1]
        %v753 = vlaneseq
        %v754 = vshrl.u32 %v753, 7
        %v755 = vsub.s32 0, %v754
        %v756 = vrot.slane %v751, %v755
        %v774 = vunpack.c.l.b16 %v735
        %v775 = vunpack.c.l.b16 %v736
        %v776 = vunpack.c.l.b16 %v737
        %v777 = vunpack.c.l.b16 %v738
        %v778 = vunpack.c.l.b16 %v739
        %v779 = vunpack.c.l.b16 %v740
        %v780 = vunpack.c.l.b16 %v741
        %v781 = vunpack.c.l.b16 %v742
        %v782 = vunpack.c.l.b16 %v743
        %v783 = vunpack.c.l.b16 %v744
        %v784 = vunpack.c.l.b16 %v745
        %v785 = vunpack.c.l.b16 %v746
        %v786 = vunpack.c.l.b16 %v747
        %v787 = vunpack.c.l.b16 %v748
        %v788 = vunpack.c.l.b16 %v749
        %v789 = vunpack.c.l.b16 %v750
        %v790 = vpack.c.b16 %v775, %v774
        %v791 = vpack.c.b16 %v777, %v776
        %v792 = vpack.c.b16 %v779, %v778
        %v793 = vpack.c.b16 %v781, %v780
        %v794 = vpack.c.b16 %v783, %v782
        %v795 = vpack.c.b16 %v785, %v784
        %v796 = vpack.c.b16 %v787, %v786
        %v797 = vpack.c.b16 %v789, %v788
        %806 = vmatprep.subr.bf16.mxu0 0
        %807 = vmatpush1.bf16.msra.mxu0 %v797
        %808 = vmatprep.subr.bf16.mxu0 0
        %809 = vmatpush1.bf16.msra.mxu0 %v796
        %810 = vmatprep.subr.bf16.mxu0 0
        %811 = vmatpush1.bf16.msra.mxu0 %v795
        %812 = vmatprep.subr.bf16.mxu0 0
        %813 = vmatpush1.bf16.msra.mxu0 %v794
        %814 = vmatprep.subr.bf16.mxu0 0
        %815 = vmatpush1.bf16.msra.mxu0 %v793
        %816 = vmatprep.subr.bf16.mxu0 0
        %817 = vmatpush1.bf16.msra.mxu0 %v792
        %818 = vmatprep.subr.bf16.mxu0 0
        %819 = vmatpush1.bf16.msra.mxu0 %v791
        %820 = vmatprep.subr.bf16.mxu0 0
        %821 = vmatpush1.bf16.msra.mxu0 %v790
        %822 = vmatprep.subr.bf16.mxu0 0
        %823 = vmatpush2.bf16.msra.mxu0 0
        %824 = vmatprep.subr.bf16.mxu0 0
        %825 = vmatpush2.bf16.msra.mxu0 0
        %826 = vmatprep.subr.bf16.mxu0 0
        %827 = vmatpush2.bf16.msra.mxu0 0
        %828 = vmatprep.subr.bf16.mxu0 0
        %829 = vmatpush2.bf16.msra.mxu0 0
        %830 = vmatprep.subr.bf16.mxu0 0
        %831 = vmatpush2.bf16.msra.mxu0 0
        %832 = vmatprep.subr.bf16.mxu0 0
        %833 = vmatpush2.bf16.msra.mxu0 0
        %834 = vmatprep.subr.bf16.mxu0 0
        %835 = vmatpush2.bf16.msra.mxu0 0
        %836 = vmatprep.subr.bf16.mxu0 0
        %837 = vmatpush2.bf16.msra.mxu0 0
        %838 = vmatprep.mubr.bf16.mxu0 0
        %839 = vmatmul.mubr.bf16.gmra.mxu0 %v719
        %v840 = vpop.f32.mrf.mxu0
        %v841 = vadd.f32 %v756, %v840
        %v842 = vpop.f32.mrf.mxu0
        %v843 = vpop.f32.mrf.mxu0
        %v844 = vadd.f32 %v756, %v843
        %v845 = vpop.f32.mrf.mxu0
        %846 = vmatprep.mubr.bf16.mxu0 0
        %847 = vmatmul.mubr.bf16.gmra.mxu0 %v720
        %v848 = vpop.f32.mrf.mxu0
        %v849 = vadd.f32 %v756, %v848
        %v850 = vpop.f32.mrf.mxu0
        %v851 = vpop.f32.mrf.mxu0
        %v852 = vadd.f32 %v756, %v851
        %v853 = vpop.f32.mrf.mxu0
        %854 = vmatprep.mubr.bf16.mxu0 0
        %855 = vmatmul.mubr.bf16.gmra.mxu0 %v721
        %v856 = vpop.f32.mrf.mxu0
        %v857 = vadd.f32 %v756, %v856
        %v858 = vpop.f32.mrf.mxu0
        %v859 = vpop.f32.mrf.mxu0
        %v860 = vadd.f32 %v756, %v859
        %v861 = vpop.f32.mrf.mxu0
        %862 = vmatprep.mubr.bf16.mxu0 0
        %863 = vmatmul.mubr.bf16.gmra.mxu0 %v722
        %v864 = vpop.f32.mrf.mxu0
        %v865 = vadd.f32 %v756, %v864
        %v866 = vpop.f32.mrf.mxu0
        %v867 = vpop.f32.mrf.mxu0
        %v868 = vadd.f32 %v756, %v867
        %v869 = vpop.f32.mrf.mxu0
        %870 = vmatprep.mubr.bf16.mxu0 0
        %871 = vmatmul.mubr.bf16.gmra.mxu0 %v723
        %v872 = vpop.f32.mrf.mxu0
        %v873 = vadd.f32 %v756, %v872
        %v874 = vpop.f32.mrf.mxu0
        %v875 = vpop.f32.mrf.mxu0
        %v876 = vadd.f32 %v756, %v875
        %v877 = vpop.f32.mrf.mxu0
        %878 = vmatprep.mubr.bf16.mxu0 0
        %879 = vmatmul.mubr.bf16.gmra.mxu0 %v724
        %v880 = vpop.f32.mrf.mxu0
        %v881 = vadd.f32 %v756, %v880
        %v882 = vpop.f32.mrf.mxu0
        %v883 = vpop.f32.mrf.mxu0
        %v884 = vadd.f32 %v756, %v883
        %v885 = vpop.f32.mrf.mxu0
        %886 = vmatprep.mubr.bf16.mxu0 0
        %887 = vmatmul.mubr.bf16.gmra.mxu0 %v725
        %v888 = vpop.f32.mrf.mxu0
        %v889 = vadd.f32 %v756, %v888
        %v890 = vpop.f32.mrf.mxu0
        %v891 = vpop.f32.mrf.mxu0
        %v892 = vadd.f32 %v756, %v891
        %v893 = vpop.f32.mrf.mxu0
        %894 = vmatprep.mubr.bf16.mxu0 0
        %895 = vmatmul.mubr.bf16.gmra.mxu0 %v726
        %v896 = vpop.f32.mrf.mxu0
        %v897 = vadd.f32 %v756, %v896
        %v898 = vpop.f32.mrf.mxu0
        %v899 = vpop.f32.mrf.mxu0
        %v900 = vadd.f32 %v756, %v899
        %v901 = vpop.f32.mrf.mxu0
        %902 = vmatprep.mubr.bf16.mxu0 0
        %903 = vmatmul.mubr.bf16.gmra.mxu0 %v727
        %v904 = vpop.f32.mrf.mxu0
        %v905 = vadd.f32 %v756, %v904
        %v906 = vpop.f32.mrf.mxu0
        %v907 = vpop.f32.mrf.mxu0
        %v908 = vadd.f32 %v756, %v907
        %v909 = vpop.f32.mrf.mxu0
        %910 = vmatprep.mubr.bf16.mxu0 0
        %911 = vmatmul.mubr.bf16.gmra.mxu0 %v728
        %v912 = vpop.f32.mrf.mxu0
        %v913 = vadd.f32 %v756, %v912
        %v914 = vpop.f32.mrf.mxu0
        %v915 = vpop.f32.mrf.mxu0
        %v916 = vadd.f32 %v756, %v915
        %v917 = vpop.f32.mrf.mxu0
        %918 = vmatprep.mubr.bf16.mxu0 0
        %919 = vmatmul.mubr.bf16.gmra.mxu0 %v729
        %v920 = vpop.f32.mrf.mxu0
        %v921 = vadd.f32 %v756, %v920
        %v922 = vpop.f32.mrf.mxu0
        %v923 = vpop.f32.mrf.mxu0
        %v924 = vadd.f32 %v756, %v923
        %v925 = vpop.f32.mrf.mxu0
        %926 = vmatprep.mubr.bf16.mxu0 0
        %927 = vmatmul.mubr.bf16.gmra.mxu0 %v730
        %v928 = vpop.f32.mrf.mxu0
        %v929 = vadd.f32 %v756, %v928
        %v930 = vpop.f32.mrf.mxu0
        %v931 = vpop.f32.mrf.mxu0
        %v932 = vadd.f32 %v756, %v931
        %v933 = vpop.f32.mrf.mxu0
        %934 = vmatprep.mubr.bf16.mxu0 0
        %935 = vmatmul.mubr.bf16.gmra.mxu0 %v731
        %v936 = vpop.f32.mrf.mxu0
        %v937 = vadd.f32 %v756, %v936
        %v938 = vpop.f32.mrf.mxu0
        %v939 = vpop.f32.mrf.mxu0
        %v940 = vadd.f32 %v756, %v939
        %v941 = vpop.f32.mrf.mxu0
        %942 = vmatprep.mubr.bf16.mxu0 0
        %943 = vmatmul.mubr.bf16.gmra.mxu0 %v732
        %v944 = vpop.f32.mrf.mxu0
        %v945 = vadd.f32 %v756, %v944
        %v946 = vpop.f32.mrf.mxu0
        %v947 = vpop.f32.mrf.mxu0
        %v948 = vadd.f32 %v756, %v947
        %v949 = vpop.f32.mrf.mxu0
        %950 = vmatprep.mubr.bf16.mxu0 0
        %951 = vmatmul.mubr.bf16.gmra.mxu0 %v733
        %v952 = vpop.f32.mrf.mxu0
        %v953 = vadd.f32 %v756, %v952
        %v954 = vpop.f32.mrf.mxu0
        %v955 = vpop.f32.mrf.mxu0
        %v956 = vadd.f32 %v756, %v955
        %v957 = vpop.f32.mrf.mxu0
        %958 = vmatprep.mubr.bf16.mxu0 0
        %959 = vmatmul.mubr.bf16.gmra.mxu0 %v734
        %v960 = vpop.f32.mrf.mxu0
        %v961 = vadd.f32 %v756, %v960
        %v962 = vpop.f32.mrf.mxu0
        %v963 = vpop.f32.mrf.mxu0
        %v964 = vadd.f32 %v756, %v963
        %v965 = vpop.f32.mrf.mxu0
        %966 = vdwg.mxu0
        %v967 = vmax.f32 %v841, 0.0
        %v968 = vmax.f32 %v844, 0.0
        %v969 = vmax.f32 %v849, 0.0
        %v970 = vmax.f32 %v852, 0.0
        %v971 = vmax.f32 %v857, 0.0
        %v972 = vmax.f32 %v860, 0.0
        %v973 = vmax.f32 %v865, 0.0
        %v974 = vmax.f32 %v868, 0.0
        %v975 = vmax.f32 %v873, 0.0
        %v976 = vmax.f32 %v876, 0.0
        %v977 = vmax.f32 %v881, 0.0
        %v978 = vmax.f32 %v884, 0.0
        %v979 = vmax.f32 %v889, 0.0
        %v980 = vmax.f32 %v892, 0.0
        %v981 = vmax.f32 %v897, 0.0
        %v982 = vmax.f32 %v900, 0.0
        %v983 = vmax.f32 %v905, 0.0
        %v984 = vmax.f32 %v908, 0.0
        %v985 = vmax.f32 %v913, 0.0
        %v986 = vmax.f32 %v916, 0.0
        %v987 = vmax.f32 %v921, 0.0
        %v988 = vmax.f32 %v924, 0.0
        %v989 = vmax.f32 %v929, 0.0
        %v990 = vmax.f32 %v932, 0.0
        %v991 = vmax.f32 %v937, 0.0
        %v992 = vmax.f32 %v940, 0.0
        %v993 = vmax.f32 %v945, 0.0
        %v994 = vmax.f32 %v948, 0.0
        %v995 = vmax.f32 %v953, 0.0
        %v996 = vmax.f32 %v956, 0.0
        %v997 = vmax.f32 %v961, 0.0
        %v998 = vmax.f32 %v964, 0.0
        %v999 = vpack.c.bf16 %v968, %v967
        %v1000 = vpack.c.bf16 %v970, %v969
        %v1001 = vpack.c.bf16 %v972, %v971
        %v1002 = vpack.c.bf16 %v974, %v973
        %v1003 = vpack.c.bf16 %v976, %v975
        %v1004 = vpack.c.bf16 %v978, %v977
        %v1005 = vpack.c.bf16 %v980, %v979
        %v1006 = vpack.c.bf16 %v982, %v981
        %v1007 = vpack.c.bf16 %v984, %v983
        %v1008 = vpack.c.bf16 %v986, %v985
        %v1009 = vpack.c.bf16 %v988, %v987
        %v1010 = vpack.c.bf16 %v990, %v989
        %v1011 = vpack.c.bf16 %v992, %v991
        %v1012 = vpack.c.bf16 %v994, %v993
        %v1013 = vpack.c.bf16 %v996, %v995
        %v1014 = vpack.c.bf16 %v998, %v997
        %v1015 = vld [vmem:[#allocation2] sm:$0xff]
        %v1016 = vld [vmem:[#allocation2 + $0x8] sm:$0xff]
        %v1017 = vld [vmem:[#allocation2 + $0x10] sm:$0xff]
        %v1018 = vld [vmem:[#allocation2 + $0x18] sm:$0xff]
        %v1019 = vld [vmem:[#allocation2 + $0x20] sm:$0xff]
        %v1020 = vld [vmem:[#allocation2 + $0x28] sm:$0xff]
        %v1021 = vld [vmem:[#allocation2 + $0x30] sm:$0xff]
        %v1022 = vld [vmem:[#allocation2 + $0x38] sm:$0xff]
        %v1023 = vld [vmem:[#allocation2 + $0x40] sm:$0xff]
        %v1024 = vld [vmem:[#allocation2 + $0x48] sm:$0xff]
        %v1025 = vld [vmem:[#allocation2 + $0x50] sm:$0xff]
        %v1026 = vld [vmem:[#allocation2 + $0x58] sm:$0xff]
        %v1027 = vld [vmem:[#allocation2 + $0x60] sm:$0xff]
        %v1028 = vld [vmem:[#allocation2 + $0x68] sm:$0xff]
        %v1029 = vld [vmem:[#allocation2 + $0x70] sm:$0xff]
        %v1030 = vld [vmem:[#allocation2 + $0x78] sm:$0xff]
        %v1031 = vld [vmem:[#allocation2 + $0x80] sm:$0xff]
        %v1032 = vld [vmem:[#allocation2 + $0x88] sm:$0xff]
        %v1033 = vld [vmem:[#allocation2 + $0x90] sm:$0xff]
        %v1034 = vld [vmem:[#allocation2 + $0x98] sm:$0xff]
        %v1035 = vld [vmem:[#allocation2 + $0xa0] sm:$0xff]
        %v1036 = vld [vmem:[#allocation2 + $0xa8] sm:$0xff]
        %v1037 = vld [vmem:[#allocation2 + $0xb0] sm:$0xff]
        %v1038 = vld [vmem:[#allocation2 + $0xb8] sm:$0xff]
        %v1039 = vld [vmem:[#allocation2 + $0xc0] sm:$0xff]
        %v1040 = vld [vmem:[#allocation2 + $0xc8] sm:$0xff]
        %v1041 = vld [vmem:[#allocation2 + $0xd0] sm:$0xff]
        %v1042 = vld [vmem:[#allocation2 + $0xd8] sm:$0xff]
        %v1043 = vld [vmem:[#allocation2 + $0xe0] sm:$0xff]
        %v1044 = vld [vmem:[#allocation2 + $0xe8] sm:$0xff]
        %v1045 = vld [vmem:[#allocation2 + $0xf0] sm:$0xff]
        %v1046 = vld [vmem:[#allocation2 + $0xf8] sm:$0xff]
        %v1047 = vld [vmem:[#allocation2 + $0x100] sm:$0xff]
        %v1048 = vld [vmem:[#allocation2 + $0x108] sm:$0xff]
        %v1049 = vld [vmem:[#allocation2 + $0x110] sm:$0xff]
        %v1050 = vld [vmem:[#allocation2 + $0x118] sm:$0xff]
        %v1051 = vld [vmem:[#allocation2 + $0x120] sm:$0xff]
        %v1052 = vld [vmem:[#allocation2 + $0x128] sm:$0xff]
        %v1053 = vld [vmem:[#allocation2 + $0x130] sm:$0xff]
        %v1054 = vld [vmem:[#allocation2 + $0x138] sm:$0xff]
        %v1055 = vld [vmem:[#allocation2 + $0x140] sm:$0xff]
        %v1056 = vld [vmem:[#allocation2 + $0x148] sm:$0xff]
        %v1057 = vld [vmem:[#allocation2 + $0x150] sm:$0xff]
        %v1058 = vld [vmem:[#allocation2 + $0x158] sm:$0xff]
        %v1059 = vld [vmem:[#allocation2 + $0x160] sm:$0xff]
        %v1060 = vld [vmem:[#allocation2 + $0x168] sm:$0xff]
        %v1061 = vld [vmem:[#allocation2 + $0x170] sm:$0xff]
        %v1062 = vld [vmem:[#allocation2 + $0x178] sm:$0xff]
        %v1063 = vld [vmem:[#allocation2 + $0x180] sm:$0xff]
        %v1064 = vld [vmem:[#allocation2 + $0x188] sm:$0xff]
        %v1065 = vld [vmem:[#allocation2 + $0x190] sm:$0xff]
        %v1066 = vld [vmem:[#allocation2 + $0x198] sm:$0xff]
        %v1067 = vld [vmem:[#allocation2 + $0x1a0] sm:$0xff]
        %v1068 = vld [vmem:[#allocation2 + $0x1a8] sm:$0xff]
        %v1069 = vld [vmem:[#allocation2 + $0x1b0] sm:$0xff]
        %v1070 = vld [vmem:[#allocation2 + $0x1b8] sm:$0xff]
        %v1071 = vld [vmem:[#allocation2 + $0x1c0] sm:$0xff]
        %v1072 = vld [vmem:[#allocation2 + $0x1c8] sm:$0xff]
        %v1073 = vld [vmem:[#allocation2 + $0x1d0] sm:$0xff]
        %v1074 = vld [vmem:[#allocation2 + $0x1d8] sm:$0xff]
        %v1075 = vld [vmem:[#allocation2 + $0x1e0] sm:$0xff]
        %v1076 = vld [vmem:[#allocation2 + $0x1e8] sm:$0xff]
        %v1077 = vld [vmem:[#allocation2 + $0x1f0] sm:$0xff]
        %v1078 = vld [vmem:[#allocation2 + $0x1f8] sm:$0xff]
        %v1143 = vunpack.c.l.b16 %v1015
        %v1144 = vunpack.c.h.b16 %v1015
        %v1145 = vunpack.c.l.b16 %v1016
        %v1146 = vunpack.c.h.b16 %v1016
        %v1147 = vunpack.c.l.b16 %v1017
        %v1148 = vunpack.c.h.b16 %v1017
        %v1149 = vunpack.c.l.b16 %v1018
        %v1150 = vunpack.c.h.b16 %v1018
        %v1151 = vunpack.c.l.b16 %v1019
        %v1152 = vunpack.c.h.b16 %v1019
        %v1153 = vunpack.c.l.b16 %v1020
        %v1154 = vunpack.c.h.b16 %v1020
        %v1155 = vunpack.c.l.b16 %v1021
        %v1156 = vunpack.c.h.b16 %v1021
        %v1157 = vunpack.c.l.b16 %v1022
        %v1158 = vunpack.c.h.b16 %v1022
        %v1159 = vunpack.c.l.b16 %v1023
        %v1160 = vunpack.c.h.b16 %v1023
        %v1161 = vunpack.c.l.b16 %v1024
        %v1162 = vunpack.c.h.b16 %v1024
        %v1163 = vunpack.c.l.b16 %v1025
        %v1164 = vunpack.c.h.b16 %v1025
        %v1165 = vunpack.c.l.b16 %v1026
        %v1166 = vunpack.c.h.b16 %v1026
        %v1167 = vunpack.c.l.b16 %v1027
        %v1168 = vunpack.c.h.b16 %v1027
        %v1169 = vunpack.c.l.b16 %v1028
        %v1170 = vunpack.c.h.b16 %v1028
        %v1171 = vunpack.c.l.b16 %v1029
        %v1172 = vunpack.c.h.b16 %v1029
        %v1173 = vunpack.c.l.b16 %v1030
        %v1174 = vunpack.c.h.b16 %v1030
        %v1175 = vunpack.c.l.b16 %v1031
        %v1176 = vunpack.c.h.b16 %v1031
        %v1177 = vunpack.c.l.b16 %v1032
        %v1178 = vunpack.c.h.b16 %v1032
        %v1179 = vunpack.c.l.b16 %v1033
        %v1180 = vunpack.c.h.b16 %v1033
        %v1181 = vunpack.c.l.b16 %v1034
        %v1182 = vunpack.c.h.b16 %v1034
        %v1183 = vunpack.c.l.b16 %v1035
        %v1184 = vunpack.c.h.b16 %v1035
        %v1185 = vunpack.c.l.b16 %v1036
        %v1186 = vunpack.c.h.b16 %v1036
        %v1187 = vunpack.c.l.b16 %v1037
        %v1188 = vunpack.c.h.b16 %v1037
        %v1189 = vunpack.c.l.b16 %v1038
        %v1190 = vunpack.c.h.b16 %v1038
        %v1191 = vunpack.c.l.b16 %v1039
        %v1192 = vunpack.c.h.b16 %v1039
        %v1193 = vunpack.c.l.b16 %v1040
        %v1194 = vunpack.c.h.b16 %v1040
        %v1195 = vunpack.c.l.b16 %v1041
        %v1196 = vunpack.c.h.b16 %v1041
        %v1197 = vunpack.c.l.b16 %v1042
        %v1198 = vunpack.c.h.b16 %v1042
        %v1199 = vunpack.c.l.b16 %v1043
        %v1200 = vunpack.c.h.b16 %v1043
        %v1201 = vunpack.c.l.b16 %v1044
        %v1202 = vunpack.c.h.b16 %v1044
        %v1203 = vunpack.c.l.b16 %v1045
        %v1204 = vunpack.c.h.b16 %v1045
        %v1205 = vunpack.c.l.b16 %v1046
        %v1206 = vunpack.c.h.b16 %v1046
        %v1207 = vunpack.c.l.b16 %v1047
        %v1208 = vunpack.c.h.b16 %v1047
        %v1209 = vunpack.c.l.b16 %v1048
        %v1210 = vunpack.c.h.b16 %v1048
        %v1211 = vunpack.c.l.b16 %v1049
        %v1212 = vunpack.c.h.b16 %v1049
        %v1213 = vunpack.c.l.b16 %v1050
        %v1214 = vunpack.c.h.b16 %v1050
        %v1215 = vunpack.c.l.b16 %v1051
        %v1216 = vunpack.c.h.b16 %v1051
        %v1217 = vunpack.c.l.b16 %v1052
        %v1218 = vunpack.c.h.b16 %v1052
        %v1219 = vunpack.c.l.b16 %v1053
        %v1220 = vunpack.c.h.b16 %v1053
        %v1221 = vunpack.c.l.b16 %v1054
        %v1222 = vunpack.c.h.b16 %v1054
        %v1223 = vunpack.c.l.b16 %v1055
        %v1224 = vunpack.c.h.b16 %v1055
        %v1225 = vunpack.c.l.b16 %v1056
        %v1226 = vunpack.c.h.b16 %v1056
        %v1227 = vunpack.c.l.b16 %v1057
        %v1228 = vunpack.c.h.b16 %v1057
        %v1229 = vunpack.c.l.b16 %v1058
        %v1230 = vunpack.c.h.b16 %v1058
        %v1231 = vunpack.c.l.b16 %v1059
        %v1232 = vunpack.c.h.b16 %v1059
        %v1233 = vunpack.c.l.b16 %v1060
        %v1234 = vunpack.c.h.b16 %v1060
        %v1235 = vunpack.c.l.b16 %v1061
        %v1236 = vunpack.c.h.b16 %v1061
        %v1237 = vunpack.c.l.b16 %v1062
        %v1238 = vunpack.c.h.b16 %v1062
        %v1239 = vunpack.c.l.b16 %v1063
        %v1240 = vunpack.c.h.b16 %v1063
        %v1241 = vunpack.c.l.b16 %v1064
        %v1242 = vunpack.c.h.b16 %v1064
        %v1243 = vunpack.c.l.b16 %v1065
        %v1244 = vunpack.c.h.b16 %v1065
        %v1245 = vunpack.c.l.b16 %v1066
        %v1246 = vunpack.c.h.b16 %v1066
        %v1247 = vunpack.c.l.b16 %v1067
        %v1248 = vunpack.c.h.b16 %v1067
        %v1249 = vunpack.c.l.b16 %v1068
        %v1250 = vunpack.c.h.b16 %v1068
        %v1251 = vunpack.c.l.b16 %v1069
        %v1252 = vunpack.c.h.b16 %v1069
        %v1253 = vunpack.c.l.b16 %v1070
        %v1254 = vunpack.c.h.b16 %v1070
        %v1255 = vunpack.c.l.b16 %v1071
        %v1256 = vunpack.c.h.b16 %v1071
        %v1257 = vunpack.c.l.b16 %v1072
        %v1258 = vunpack.c.h.b16 %v1072
        %v1259 = vunpack.c.l.b16 %v1073
        %v1260 = vunpack.c.h.b16 %v1073
        %v1261 = vunpack.c.l.b16 %v1074
        %v1262 = vunpack.c.h.b16 %v1074
        %v1263 = vunpack.c.l.b16 %v1075
        %v1264 = vunpack.c.h.b16 %v1075
        %v1265 = vunpack.c.l.b16 %v1076
        %v1266 = vunpack.c.h.b16 %v1076
        %v1267 = vunpack.c.l.b16 %v1077
        %v1268 = vunpack.c.h.b16 %v1077
        %v1269 = vunpack.c.l.b16 %v1078
        %v1270 = vunpack.c.h.b16 %v1078
        %v1271 = vpack.c.b16 %v1151, %v1143
        %v1272 = vpack.c.b16 %v1152, %v1144
        %v1273 = vpack.c.b16 %v1153, %v1145
        %v1274 = vpack.c.b16 %v1154, %v1146
        %v1275 = vpack.c.b16 %v1155, %v1147
        %v1276 = vpack.c.b16 %v1156, %v1148
        %v1277 = vpack.c.b16 %v1157, %v1149
        %v1278 = vpack.c.b16 %v1158, %v1150
        %v1279 = vpack.c.b16 %v1167, %v1159
        %v1280 = vpack.c.b16 %v1168, %v1160
        %v1281 = vpack.c.b16 %v1169, %v1161
        %v1282 = vpack.c.b16 %v1170, %v1162
        %v1283 = vpack.c.b16 %v1171, %v1163
        %v1284 = vpack.c.b16 %v1172, %v1164
        %v1285 = vpack.c.b16 %v1173, %v1165
        %v1286 = vpack.c.b16 %v1174, %v1166
        %v1287 = vpack.c.b16 %v1183, %v1175
        %v1288 = vpack.c.b16 %v1184, %v1176
        %v1289 = vpack.c.b16 %v1185, %v1177
        %v1290 = vpack.c.b16 %v1186, %v1178
        %v1291 = vpack.c.b16 %v1187, %v1179
        %v1292 = vpack.c.b16 %v1188, %v1180
        %v1293 = vpack.c.b16 %v1189, %v1181
        %v1294 = vpack.c.b16 %v1190, %v1182
        %v1295 = vpack.c.b16 %v1199, %v1191
        %v1296 = vpack.c.b16 %v1200, %v1192
        %v1297 = vpack.c.b16 %v1201, %v1193
        %v1298 = vpack.c.b16 %v1202, %v1194
        %v1299 = vpack.c.b16 %v1203, %v1195
        %v1300 = vpack.c.b16 %v1204, %v1196
        %v1301 = vpack.c.b16 %v1205, %v1197
        %v1302 = vpack.c.b16 %v1206, %v1198
        %v1303 = vpack.c.b16 %v1215, %v1207
        %v1304 = vpack.c.b16 %v1216, %v1208
        %v1305 = vpack.c.b16 %v1217, %v1209
        %v1306 = vpack.c.b16 %v1218, %v1210
        %v1307 = vpack.c.b16 %v1219, %v1211
        %v1308 = vpack.c.b16 %v1220, %v1212
        %v1309 = vpack.c.b16 %v1221, %v1213
        %v1310 = vpack.c.b16 %v1222, %v1214
        %v1311 = vpack.c.b16 %v1231, %v1223
        %v1312 = vpack.c.b16 %v1232, %v1224
        %v1313 = vpack.c.b16 %v1233, %v1225
        %v1314 = vpack.c.b16 %v1234, %v1226
        %v1315 = vpack.c.b16 %v1235, %v1227
        %v1316 = vpack.c.b16 %v1236, %v1228
        %v1317 = vpack.c.b16 %v1237, %v1229
        %v1318 = vpack.c.b16 %v1238, %v1230
        %v1319 = vpack.c.b16 %v1247, %v1239
        %v1320 = vpack.c.b16 %v1248, %v1240
        %v1321 = vpack.c.b16 %v1249, %v1241
        %v1322 = vpack.c.b16 %v1250, %v1242
        %v1323 = vpack.c.b16 %v1251, %v1243
        %v1324 = vpack.c.b16 %v1252, %v1244
        %v1325 = vpack.c.b16 %v1253, %v1245
        %v1326 = vpack.c.b16 %v1254, %v1246
        %v1327 = vpack.c.b16 %v1263, %v1255
        %v1328 = vpack.c.b16 %v1264, %v1256
        %v1329 = vpack.c.b16 %v1265, %v1257
        %v1330 = vpack.c.b16 %v1266, %v1258
        %v1331 = vpack.c.b16 %v1267, %v1259
        %v1332 = vpack.c.b16 %v1268, %v1260
        %v1333 = vpack.c.b16 %v1269, %v1261
        %v1334 = vpack.c.b16 %v1270, %v1262
        %1399 = vmatprep.subr.bf16.mxu0 %v1328
        %1400 = vmatpush1.bf16.msra.mxu0 %v1327
        %1401 = vmatprep.subr.bf16.mxu0 %v1320
        %1402 = vmatpush1.bf16.msra.mxu0 %v1319
        %1403 = vmatprep.subr.bf16.mxu0 %v1312
        %1404 = vmatpush1.bf16.msra.mxu0 %v1311
        %1405 = vmatprep.subr.bf16.mxu0 %v1304
        %1406 = vmatpush1.bf16.msra.mxu0 %v1303
        %1407 = vmatprep.subr.bf16.mxu0 %v1296
        %1408 = vmatpush1.bf16.msra.mxu0 %v1295
        %1409 = vmatprep.subr.bf16.mxu0 %v1288
        %1410 = vmatpush1.bf16.msra.mxu0 %v1287
        %1411 = vmatprep.subr.bf16.mxu0 %v1280
        %1412 = vmatpush1.bf16.msra.mxu0 %v1279
        %1413 = vmatprep.subr.bf16.mxu0 %v1272
        %1414 = vmatpush1.bf16.msra.mxu0 %v1271
        %1415 = vmatprep.subr.bf16.mxu0 0
        %1416 = vmatpush2.bf16.msra.mxu0 0
        %1417 = vmatprep.subr.bf16.mxu0 0
        %1418 = vmatpush2.bf16.msra.mxu0 0
        %1419 = vmatprep.subr.bf16.mxu0 0
        %1420 = vmatpush2.bf16.msra.mxu0 0
        %1421 = vmatprep.subr.bf16.mxu0 0
        %1422 = vmatpush2.bf16.msra.mxu0 0
        %1423 = vmatprep.subr.bf16.mxu0 0
        %1424 = vmatpush2.bf16.msra.mxu0 0
        %1425 = vmatprep.subr.bf16.mxu0 0
        %1426 = vmatpush2.bf16.msra.mxu0 0
        %1427 = vmatprep.subr.bf16.mxu0 0
        %1428 = vmatpush2.bf16.msra.mxu0 0
        %1429 = vmatprep.subr.bf16.mxu0 0
        %1430 = vmatpush2.bf16.msra.mxu0 0
        %1431 = vmatprep.mubr.bf16.mxu0 0
        %1432 = vmatmul.mubr.bf16.gmra.mxu0 %v999
        %v1433 = vpop.f32.mrf.mxu0
        %v1434 = vadd.f32 0.0, %v1433
        %v1435 = vpop.f32.mrf.mxu0
        %v1436 = vadd.f32 0.0, %v1435
        %v1437 = vpop.f32.mrf.mxu0
        %v1438 = vadd.f32 0.0, %v1437
        %v1439 = vpop.f32.mrf.mxu0
        %v1440 = vadd.f32 0.0, %v1439
        %1441 = vmatprep.mubr.bf16.mxu0 0
        %1442 = vmatmul.mubr.bf16.gmra.mxu0 %v1000
        %v1443 = vpop.f32.mrf.mxu0
        %v1444 = vadd.f32 0.0, %v1443
        %v1445 = vpop.f32.mrf.mxu0
        %v1446 = vadd.f32 0.0, %v1445
        %v1447 = vpop.f32.mrf.mxu0
        %v1448 = vadd.f32 0.0, %v1447
        %v1449 = vpop.f32.mrf.mxu0
        %v1450 = vadd.f32 0.0, %v1449
        %1451 = vmatprep.mubr.bf16.mxu0 0
        %1452 = vmatmul.mubr.bf16.gmra.mxu0 %v1001
        %v1453 = vpop.f32.mrf.mxu0
        %v1454 = vadd.f32 0.0, %v1453
        %v1455 = vpop.f32.mrf.mxu0
        %v1456 = vadd.f32 0.0, %v1455
        %v1457 = vpop.f32.mrf.mxu0
        %v1458 = vadd.f32 0.0, %v1457
        %v1459 = vpop.f32.mrf.mxu0
        %v1460 = vadd.f32 0.0, %v1459
        %1461 = vmatprep.mubr.bf16.mxu0 0
        %1462 = vmatmul.mubr.bf16.gmra.mxu0 %v1002
        %v1463 = vpop.f32.mrf.mxu0
        %v1464 = vadd.f32 0.0, %v1463
        %v1465 = vpop.f32.mrf.mxu0
        %v1466 = vadd.f32 0.0, %v1465
        %v1467 = vpop.f32.mrf.mxu0
        %v1468 = vadd.f32 0.0, %v1467
        %v1469 = vpop.f32.mrf.mxu0
        %v1470 = vadd.f32 0.0, %v1469
        %1471 = vmatprep.mubr.bf16.mxu0 0
        %1472 = vmatmul.mubr.bf16.gmra.mxu0 %v1003
        %v1473 = vpop.f32.mrf.mxu0
        %v1474 = vadd.f32 0.0, %v1473
        %v1475 = vpop.f32.mrf.mxu0
        %v1476 = vadd.f32 0.0, %v1475
        %v1477 = vpop.f32.mrf.mxu0
        %v1478 = vadd.f32 0.0, %v1477
        %v1479 = vpop.f32.mrf.mxu0
        %v1480 = vadd.f32 0.0, %v1479
        %1481 = vmatprep.mubr.bf16.mxu0 0
        %1482 = vmatmul.mubr.bf16.gmra.mxu0 %v1004
        %v1483 = vpop.f32.mrf.mxu0
        %v1484 = vadd.f32 0.0, %v1483
        %v1485 = vpop.f32.mrf.mxu0
        %v1486 = vadd.f32 0.0, %v1485
        %v1487 = vpop.f32.mrf.mxu0
        %v1488 = vadd.f32 0.0, %v1487
        %v1489 = vpop.f32.mrf.mxu0
        %v1490 = vadd.f32 0.0, %v1489
        %1491 = vmatprep.mubr.bf16.mxu0 0
        %1492 = vmatmul.mubr.bf16.gmra.mxu0 %v1005
        %v1493 = vpop.f32.mrf.mxu0
        %v1494 = vadd.f32 0.0, %v1493
        %v1495 = vpop.f32.mrf.mxu0
        %v1496 = vadd.f32 0.0, %v1495
        %v1497 = vpop.f32.mrf.mxu0
        %v1498 = vadd.f32 0.0, %v1497
        %v1499 = vpop.f32.mrf.mxu0
        %v1500 = vadd.f32 0.0, %v1499
        %1501 = vmatprep.mubr.bf16.mxu0 0
        %1502 = vmatmul.mubr.bf16.gmra.mxu0 %v1006
        %v1503 = vpop.f32.mrf.mxu0
        %v1504 = vadd.f32 0.0, %v1503
        %v1505 = vpop.f32.mrf.mxu0
        %v1506 = vadd.f32 0.0, %v1505
        %v1507 = vpop.f32.mrf.mxu0
        %v1508 = vadd.f32 0.0, %v1507
        %v1509 = vpop.f32.mrf.mxu0
        %v1510 = vadd.f32 0.0, %v1509
        %1511 = vmatprep.mubr.bf16.mxu0 0
        %1512 = vmatmul.mubr.bf16.gmra.mxu0 %v1007
        %v1513 = vpop.f32.mrf.mxu0
        %v1514 = vadd.f32 0.0, %v1513
        %v1515 = vpop.f32.mrf.mxu0
        %v1516 = vadd.f32 0.0, %v1515
        %v1517 = vpop.f32.mrf.mxu0
        %v1518 = vadd.f32 0.0, %v1517
        %v1519 = vpop.f32.mrf.mxu0
        %v1520 = vadd.f32 0.0, %v1519
        %1521 = vmatprep.mubr.bf16.mxu0 0
        %1522 = vmatmul.mubr.bf16.gmra.mxu0 %v1008
        %v1523 = vpop.f32.mrf.mxu0
        %v1524 = vadd.f32 0.0, %v1523
        %v1525 = vpop.f32.mrf.mxu0
        %v1526 = vadd.f32 0.0, %v1525
        %v1527 = vpop.f32.mrf.mxu0
        %v1528 = vadd.f32 0.0, %v1527
        %v1529 = vpop.f32.mrf.mxu0
        %v1530 = vadd.f32 0.0, %v1529
        %1531 = vmatprep.mubr.bf16.mxu0 0
        %1532 = vmatmul.mubr.bf16.gmra.mxu0 %v1009
        %v1533 = vpop.f32.mrf.mxu0
        %v1534 = vadd.f32 0.0, %v1533
        %v1535 = vpop.f32.mrf.mxu0
        %v1536 = vadd.f32 0.0, %v1535
        %v1537 = vpop.f32.mrf.mxu0
        %v1538 = vadd.f32 0.0, %v1537
        %v1539 = vpop.f32.mrf.mxu0
        %v1540 = vadd.f32 0.0, %v1539
        %1541 = vmatprep.mubr.bf16.mxu0 0
        %1542 = vmatmul.mubr.bf16.gmra.mxu0 %v1010
        %v1543 = vpop.f32.mrf.mxu0
        %v1544 = vadd.f32 0.0, %v1543
        %v1545 = vpop.f32.mrf.mxu0
        %v1546 = vadd.f32 0.0, %v1545
        %v1547 = vpop.f32.mrf.mxu0
        %v1548 = vadd.f32 0.0, %v1547
        %v1549 = vpop.f32.mrf.mxu0
        %v1550 = vadd.f32 0.0, %v1549
        %1551 = vmatprep.mubr.bf16.mxu0 0
        %1552 = vmatmul.mubr.bf16.gmra.mxu0 %v1011
        %v1553 = vpop.f32.mrf.mxu0
        %v1554 = vadd.f32 0.0, %v1553
        %v1555 = vpop.f32.mrf.mxu0
        %v1556 = vadd.f32 0.0, %v1555
        %v1557 = vpop.f32.mrf.mxu0
        %v1558 = vadd.f32 0.0, %v1557
        %v1559 = vpop.f32.mrf.mxu0
        %v1560 = vadd.f32 0.0, %v1559
        %1561 = vmatprep.mubr.bf16.mxu0 0
        %1562 = vmatmul.mubr.bf16.gmra.mxu0 %v1012
        %v1563 = vpop.f32.mrf.mxu0
        %v1564 = vadd.f32 0.0, %v1563
        %v1565 = vpop.f32.mrf.mxu0
        %v1566 = vadd.f32 0.0, %v1565
        %v1567 = vpop.f32.mrf.mxu0
        %v1568 = vadd.f32 0.0, %v1567
        %v1569 = vpop.f32.mrf.mxu0
        %v1570 = vadd.f32 0.0, %v1569
        %1571 = vmatprep.mubr.bf16.mxu0 0
        %1572 = vmatmul.mubr.bf16.gmra.mxu0 %v1013
        %v1573 = vpop.f32.mrf.mxu0
        %v1574 = vadd.f32 0.0, %v1573
        %v1575 = vpop.f32.mrf.mxu0
        %v1576 = vadd.f32 0.0, %v1575
        %v1577 = vpop.f32.mrf.mxu0
        %v1578 = vadd.f32 0.0, %v1577
        %v1579 = vpop.f32.mrf.mxu0
        %v1580 = vadd.f32 0.0, %v1579
        %1581 = vmatprep.mubr.bf16.mxu0 0
        %1582 = vmatmul.mubr.bf16.gmra.mxu0 %v1014
        %v1583 = vpop.f32.mrf.mxu0
        %v1584 = vadd.f32 0.0, %v1583
        %v1585 = vpop.f32.mrf.mxu0
        %v1586 = vadd.f32 0.0, %v1585
        %v1587 = vpop.f32.mrf.mxu0
        %v1588 = vadd.f32 0.0, %v1587
        %v1589 = vpop.f32.mrf.mxu0
        %v1590 = vadd.f32 0.0, %v1589
        %1591 = vdwg.mxu0
        %1592 = vmatprep.subr.bf16.mxu0 %v1330
        %1593 = vmatpush1.bf16.msra.mxu0 %v1329
        %1594 = vmatprep.subr.bf16.mxu0 %v1322
        %1595 = vmatpush1.bf16.msra.mxu0 %v1321
        %1596 = vmatprep.subr.bf16.mxu0 %v1314
        %1597 = vmatpush1.bf16.msra.mxu0 %v1313
        %1598 = vmatprep.subr.bf16.mxu0 %v1306
        %1599 = vmatpush1.bf16.msra.mxu0 %v1305
        %1600 = vmatprep.subr.bf16.mxu0 %v1298
        %1601 = vmatpush1.bf16.msra.mxu0 %v1297
        %1602 = vmatprep.subr.bf16.mxu0 %v1290
        %1603 = vmatpush1.bf16.msra.mxu0 %v1289
        %1604 = vmatprep.subr.bf16.mxu0 %v1282
        %1605 = vmatpush1.bf16.msra.mxu0 %v1281
        %1606 = vmatprep.subr.bf16.mxu0 %v1274
        %1607 = vmatpush1.bf16.msra.mxu0 %v1273
        %1608 = vmatprep.subr.bf16.mxu0 0
        %1609 = vmatpush2.bf16.msra.mxu0 0
        %1610 = vmatprep.subr.bf16.mxu0 0
        %1611 = vmatpush2.bf16.msra.mxu0 0
        %1612 = vmatprep.subr.bf16.mxu0 0
        %1613 = vmatpush2.bf16.msra.mxu0 0
        %1614 = vmatprep.subr.bf16.mxu0 0
        %1615 = vmatpush2.bf16.msra.mxu0 0
        %1616 = vmatprep.subr.bf16.mxu0 0
        %1617 = vmatpush2.bf16.msra.mxu0 0
        %1618 = vmatprep.subr.bf16.mxu0 0
        %1619 = vmatpush2.bf16.msra.mxu0 0
        %1620 = vmatprep.subr.bf16.mxu0 0
        %1621 = vmatpush2.bf16.msra.mxu0 0
        %1622 = vmatprep.subr.bf16.mxu0 0
        %1623 = vmatpush2.bf16.msra.mxu0 0
        %1624 = vmatprep.mubr.bf16.mxu0 0
        %1625 = vmatmul.mubr.bf16.gmra.mxu0 %v999
        %v1626 = vpop.f32.mrf.mxu0
        %v1627 = vadd.f32 0.0, %v1626
        %v1628 = vpop.f32.mrf.mxu0
        %v1629 = vadd.f32 0.0, %v1628
        %v1630 = vpop.f32.mrf.mxu0
        %v1631 = vadd.f32 0.0, %v1630
        %v1632 = vpop.f32.mrf.mxu0
        %v1633 = vadd.f32 0.0, %v1632
        %1634 = vmatprep.mubr.bf16.mxu0 0
        %1635 = vmatmul.mubr.bf16.gmra.mxu0 %v1000
        %v1636 = vpop.f32.mrf.mxu0
        %v1637 = vadd.f32 0.0, %v1636
        %v1638 = vpop.f32.mrf.mxu0
        %v1639 = vadd.f32 0.0, %v1638
        %v1640 = vpop.f32.mrf.mxu0
        %v1641 = vadd.f32 0.0, %v1640
        %v1642 = vpop.f32.mrf.mxu0
        %v1643 = vadd.f32 0.0, %v1642
        %1644 = vmatprep.mubr.bf16.mxu0 0
        %1645 = vmatmul.mubr.bf16.gmra.mxu0 %v1001
        %v1646 = vpop.f32.mrf.mxu0
        %v1647 = vadd.f32 0.0, %v1646
        %v1648 = vpop.f32.mrf.mxu0
        %v1649 = vadd.f32 0.0, %v1648
        %v1650 = vpop.f32.mrf.mxu0
        %v1651 = vadd.f32 0.0, %v1650
        %v1652 = vpop.f32.mrf.mxu0
        %v1653 = vadd.f32 0.0, %v1652
        %1654 = vmatprep.mubr.bf16.mxu0 0
        %1655 = vmatmul.mubr.bf16.gmra.mxu0 %v1002
        %v1656 = vpop.f32.mrf.mxu0
        %v1657 = vadd.f32 0.0, %v1656
        %v1658 = vpop.f32.mrf.mxu0
        %v1659 = vadd.f32 0.0, %v1658
        %v1660 = vpop.f32.mrf.mxu0
        %v1661 = vadd.f32 0.0, %v1660
        %v1662 = vpop.f32.mrf.mxu0
        %v1663 = vadd.f32 0.0, %v1662
        %1664 = vmatprep.mubr.bf16.mxu0 0
        %1665 = vmatmul.mubr.bf16.gmra.mxu0 %v1003
        %v1666 = vpop.f32.mrf.mxu0
        %v1667 = vadd.f32 0.0, %v1666
        %v1668 = vpop.f32.mrf.mxu0
        %v1669 = vadd.f32 0.0, %v1668
        %v1670 = vpop.f32.mrf.mxu0
        %v1671 = vadd.f32 0.0, %v1670
        %v1672 = vpop.f32.mrf.mxu0
        %v1673 = vadd.f32 0.0, %v1672
        %1674 = vmatprep.mubr.bf16.mxu0 0
        %1675 = vmatmul.mubr.bf16.gmra.mxu0 %v1004
        %v1676 = vpop.f32.mrf.mxu0
        %v1677 = vadd.f32 0.0, %v1676
        %v1678 = vpop.f32.mrf.mxu0
        %v1679 = vadd.f32 0.0, %v1678
        %v1680 = vpop.f32.mrf.mxu0
        %v1681 = vadd.f32 0.0, %v1680
        %v1682 = vpop.f32.mrf.mxu0
        %v1683 = vadd.f32 0.0, %v1682
        %1684 = vmatprep.mubr.bf16.mxu0 0
        %1685 = vmatmul.mubr.bf16.gmra.mxu0 %v1005
        %v1686 = vpop.f32.mrf.mxu0
        %v1687 = vadd.f32 0.0, %v1686
        %v1688 = vpop.f32.mrf.mxu0
        %v1689 = vadd.f32 0.0, %v1688
        %v1690 = vpop.f32.mrf.mxu0
        %v1691 = vadd.f32 0.0, %v1690
        %v1692 = vpop.f32.mrf.mxu0
        %v1693 = vadd.f32 0.0, %v1692
        %1694 = vmatprep.mubr.bf16.mxu0 0
        %1695 = vmatmul.mubr.bf16.gmra.mxu0 %v1006
        %v1696 = vpop.f32.mrf.mxu0
        %v1697 = vadd.f32 0.0, %v1696
        %v1698 = vpop.f32.mrf.mxu0
        %v1699 = vadd.f32 0.0, %v1698
        %v1700 = vpop.f32.mrf.mxu0
        %v1701 = vadd.f32 0.0, %v1700
        %v1702 = vpop.f32.mrf.mxu0
        %v1703 = vadd.f32 0.0, %v1702
        %1704 = vmatprep.mubr.bf16.mxu0 0
        %1705 = vmatmul.mubr.bf16.gmra.mxu0 %v1007
        %v1706 = vpop.f32.mrf.mxu0
        %v1707 = vadd.f32 0.0, %v1706
        %v1708 = vpop.f32.mrf.mxu0
        %v1709 = vadd.f32 0.0, %v1708
        %v1710 = vpop.f32.mrf.mxu0
        %v1711 = vadd.f32 0.0, %v1710
        %v1712 = vpop.f32.mrf.mxu0
        %v1713 = vadd.f32 0.0, %v1712
        %1714 = vmatprep.mubr.bf16.mxu0 0
        %1715 = vmatmul.mubr.bf16.gmra.mxu0 %v1008
        %v1716 = vpop.f32.mrf.mxu0
        %v1717 = vadd.f32 0.0, %v1716
        %v1718 = vpop.f32.mrf.mxu0
        %v1719 = vadd.f32 0.0, %v1718
        %v1720 = vpop.f32.mrf.mxu0
        %v1721 = vadd.f32 0.0, %v1720
        %v1722 = vpop.f32.mrf.mxu0
        %v1723 = vadd.f32 0.0, %v1722
        %1724 = vmatprep.mubr.bf16.mxu0 0
        %1725 = vmatmul.mubr.bf16.gmra.mxu0 %v1009
        %v1726 = vpop.f32.mrf.mxu0
        %v1727 = vadd.f32 0.0, %v1726
        %v1728 = vpop.f32.mrf.mxu0
        %v1729 = vadd.f32 0.0, %v1728
        %v1730 = vpop.f32.mrf.mxu0
        %v1731 = vadd.f32 0.0, %v1730
        %v1732 = vpop.f32.mrf.mxu0
        %v1733 = vadd.f32 0.0, %v1732
        %1734 = vmatprep.mubr.bf16.mxu0 0
        %1735 = vmatmul.mubr.bf16.gmra.mxu0 %v1010
        %v1736 = vpop.f32.mrf.mxu0
        %v1737 = vadd.f32 0.0, %v1736
        %v1738 = vpop.f32.mrf.mxu0
        %v1739 = vadd.f32 0.0, %v1738
        %v1740 = vpop.f32.mrf.mxu0
        %v1741 = vadd.f32 0.0, %v1740
        %v1742 = vpop.f32.mrf.mxu0
        %v1743 = vadd.f32 0.0, %v1742
        %1744 = vmatprep.mubr.bf16.mxu0 0
        %1745 = vmatmul.mubr.bf16.gmra.mxu0 %v1011
        %v1746 = vpop.f32.mrf.mxu0
        %v1747 = vadd.f32 0.0, %v1746
        %v1748 = vpop.f32.mrf.mxu0
        %v1749 = vadd.f32 0.0, %v1748
        %v1750 = vpop.f32.mrf.mxu0
        %v1751 = vadd.f32 0.0, %v1750
        %v1752 = vpop.f32.mrf.mxu0
        %v1753 = vadd.f32 0.0, %v1752
        %1754 = vmatprep.mubr.bf16.mxu0 0
        %1755 = vmatmul.mubr.bf16.gmra.mxu0 %v1012
        %v1756 = vpop.f32.mrf.mxu0
        %v1757 = vadd.f32 0.0, %v1756
        %v1758 = vpop.f32.mrf.mxu0
        %v1759 = vadd.f32 0.0, %v1758
        %v1760 = vpop.f32.mrf.mxu0
        %v1761 = vadd.f32 0.0, %v1760
        %v1762 = vpop.f32.mrf.mxu0
        %v1763 = vadd.f32 0.0, %v1762
        %1764 = vmatprep.mubr.bf16.mxu0 0
        %1765 = vmatmul.mubr.bf16.gmra.mxu0 %v1013
        %v1766 = vpop.f32.mrf.mxu0
        %v1767 = vadd.f32 0.0, %v1766
        %v1768 = vpop.f32.mrf.mxu0
        %v1769 = vadd.f32 0.0, %v1768
        %v1770 = vpop.f32.mrf.mxu0
        %v1771 = vadd.f32 0.0, %v1770
        %v1772 = vpop.f32.mrf.mxu0
        %v1773 = vadd.f32 0.0, %v1772
        %1774 = vmatprep.mubr.bf16.mxu0 0
        %1775 = vmatmul.mubr.bf16.gmra.mxu0 %v1014
        %v1776 = vpop.f32.mrf.mxu0
        %v1777 = vadd.f32 0.0, %v1776
        %v1778 = vpop.f32.mrf.mxu0
        %v1779 = vadd.f32 0.0, %v1778
        %v1780 = vpop.f32.mrf.mxu0
        %v1781 = vadd.f32 0.0, %v1780
        %v1782 = vpop.f32.mrf.mxu0
        %v1783 = vadd.f32 0.0, %v1782
        %1784 = vdwg.mxu0
        %1785 = vmatprep.subr.bf16.mxu0 %v1332
        %1786 = vmatpush1.bf16.msra.mxu0 %v1331
        %1787 = vmatprep.subr.bf16.mxu0 %v1324
        %1788 = vmatpush1.bf16.msra.mxu0 %v1323
        %1789 = vmatprep.subr.bf16.mxu0 %v1316
        %1790 = vmatpush1.bf16.msra.mxu0 %v1315
        %1791 = vmatprep.subr.bf16.mxu0 %v1308
        %1792 = vmatpush1.bf16.msra.mxu0 %v1307
        %1793 = vmatprep.subr.bf16.mxu0 %v1300
        %1794 = vmatpush1.bf16.msra.mxu0 %v1299
        %1795 = vmatprep.subr.bf16.mxu0 %v1292
        %1796 = vmatpush1.bf16.msra.mxu0 %v1291
        %1797 = vmatprep.subr.bf16.mxu0 %v1284
        %1798 = vmatpush1.bf16.msra.mxu0 %v1283
        %1799 = vmatprep.subr.bf16.mxu0 %v1276
        %1800 = vmatpush1.bf16.msra.mxu0 %v1275
        %1801 = vmatprep.subr.bf16.mxu0 0
        %1802 = vmatpush2.bf16.msra.mxu0 0
        %1803 = vmatprep.subr.bf16.mxu0 0
        %1804 = vmatpush2.bf16.msra.mxu0 0
        %1805 = vmatprep.subr.bf16.mxu0 0
        %1806 = vmatpush2.bf16.msra.mxu0 0
        %1807 = vmatprep.subr.bf16.mxu0 0
        %1808 = vmatpush2.bf16.msra.mxu0 0
        %1809 = vmatprep.subr.bf16.mxu0 0
        %1810 = vmatpush2.bf16.msra.mxu0 0
        %1811 = vmatprep.subr.bf16.mxu0 0
        %1812 = vmatpush2.bf16.msra.mxu0 0
        %1813 = vmatprep.subr.bf16.mxu0 0
        %1814 = vmatpush2.bf16.msra.mxu0 0
        %1815 = vmatprep.subr.bf16.mxu0 0
        %1816 = vmatpush2.bf16.msra.mxu0 0
        %1817 = vmatprep.mubr.bf16.mxu0 0
        %1818 = vmatmul.mubr.bf16.gmra.mxu0 %v999
        %v1819 = vpop.f32.mrf.mxu0
        %v1820 = vadd.f32 0.0, %v1819
        %v1821 = vpop.f32.mrf.mxu0
        %v1822 = vadd.f32 0.0, %v1821
        %v1823 = vpop.f32.mrf.mxu0
        %v1824 = vadd.f32 0.0, %v1823
        %v1825 = vpop.f32.mrf.mxu0
        %v1826 = vadd.f32 0.0, %v1825
        %1827 = vmatprep.mubr.bf16.mxu0 0
        %1828 = vmatmul.mubr.bf16.gmra.mxu0 %v1000
        %v1829 = vpop.f32.mrf.mxu0
        %v1830 = vadd.f32 0.0, %v1829
        %v1831 = vpop.f32.mrf.mxu0
        %v1832 = vadd.f32 0.0, %v1831
        %v1833 = vpop.f32.mrf.mxu0
        %v1834 = vadd.f32 0.0, %v1833
        %v1835 = vpop.f32.mrf.mxu0
        %v1836 = vadd.f32 0.0, %v1835
        %1837 = vmatprep.mubr.bf16.mxu0 0
        %1838 = vmatmul.mubr.bf16.gmra.mxu0 %v1001
        %v1839 = vpop.f32.mrf.mxu0
        %v1840 = vadd.f32 0.0, %v1839
        %v1841 = vpop.f32.mrf.mxu0
        %v1842 = vadd.f32 0.0, %v1841
        %v1843 = vpop.f32.mrf.mxu0
        %v1844 = vadd.f32 0.0, %v1843
        %v1845 = vpop.f32.mrf.mxu0
        %v1846 = vadd.f32 0.0, %v1845
        %1847 = vmatprep.mubr.bf16.mxu0 0
        %1848 = vmatmul.mubr.bf16.gmra.mxu0 %v1002
        %v1849 = vpop.f32.mrf.mxu0
        %v1850 = vadd.f32 0.0, %v1849
        %v1851 = vpop.f32.mrf.mxu0
        %v1852 = vadd.f32 0.0, %v1851
        %v1853 = vpop.f32.mrf.mxu0
        %v1854 = vadd.f32 0.0, %v1853
        %v1855 = vpop.f32.mrf.mxu0
        %v1856 = vadd.f32 0.0, %v1855
        %1857 = vmatprep.mubr.bf16.mxu0 0
        %1858 = vmatmul.mubr.bf16.gmra.mxu0 %v1003
        %v1859 = vpop.f32.mrf.mxu0
        %v1860 = vadd.f32 0.0, %v1859
        %v1861 = vpop.f32.mrf.mxu0
        %v1862 = vadd.f32 0.0, %v1861
        %v1863 = vpop.f32.mrf.mxu0
        %v1864 = vadd.f32 0.0, %v1863
        %v1865 = vpop.f32.mrf.mxu0
        %v1866 = vadd.f32 0.0, %v1865
        %1867 = vmatprep.mubr.bf16.mxu0 0
        %1868 = vmatmul.mubr.bf16.gmra.mxu0 %v1004
        %v1869 = vpop.f32.mrf.mxu0
        %v1870 = vadd.f32 0.0, %v1869
        %v1871 = vpop.f32.mrf.mxu0
        %v1872 = vadd.f32 0.0, %v1871
        %v1873 = vpop.f32.mrf.mxu0
        %v1874 = vadd.f32 0.0, %v1873
        %v1875 = vpop.f32.mrf.mxu0
        %v1876 = vadd.f32 0.0, %v1875
        %1877 = vmatprep.mubr.bf16.mxu0 0
        %1878 = vmatmul.mubr.bf16.gmra.mxu0 %v1005
        %v1879 = vpop.f32.mrf.mxu0
        %v1880 = vadd.f32 0.0, %v1879
        %v1881 = vpop.f32.mrf.mxu0
        %v1882 = vadd.f32 0.0, %v1881
        %v1883 = vpop.f32.mrf.mxu0
        %v1884 = vadd.f32 0.0, %v1883
        %v1885 = vpop.f32.mrf.mxu0
        %v1886 = vadd.f32 0.0, %v1885
        %1887 = vmatprep.mubr.bf16.mxu0 0
        %1888 = vmatmul.mubr.bf16.gmra.mxu0 %v1006
        %v1889 = vpop.f32.mrf.mxu0
        %v1890 = vadd.f32 0.0, %v1889
        %v1891 = vpop.f32.mrf.mxu0
        %v1892 = vadd.f32 0.0, %v1891
        %v1893 = vpop.f32.mrf.mxu0
        %v1894 = vadd.f32 0.0, %v1893
        %v1895 = vpop.f32.mrf.mxu0
        %v1896 = vadd.f32 0.0, %v1895
        %1897 = vmatprep.mubr.bf16.mxu0 0
        %1898 = vmatmul.mubr.bf16.gmra.mxu0 %v1007
        %v1899 = vpop.f32.mrf.mxu0
        %v1900 = vadd.f32 0.0, %v1899
        %v1901 = vpop.f32.mrf.mxu0
        %v1902 = vadd.f32 0.0, %v1901
        %v1903 = vpop.f32.mrf.mxu0
        %v1904 = vadd.f32 0.0, %v1903
        %v1905 = vpop.f32.mrf.mxu0
        %v1906 = vadd.f32 0.0, %v1905
        %1907 = vmatprep.mubr.bf16.mxu0 0
        %1908 = vmatmul.mubr.bf16.gmra.mxu0 %v1008
        %v1909 = vpop.f32.mrf.mxu0
        %v1910 = vadd.f32 0.0, %v1909
        %v1911 = vpop.f32.mrf.mxu0
        %v1912 = vadd.f32 0.0, %v1911
        %v1913 = vpop.f32.mrf.mxu0
        %v1914 = vadd.f32 0.0, %v1913
        %v1915 = vpop.f32.mrf.mxu0
        %v1916 = vadd.f32 0.0, %v1915
        %1917 = vmatprep.mubr.bf16.mxu0 0
        %1918 = vmatmul.mubr.bf16.gmra.mxu0 %v1009
        %v1919 = vpop.f32.mrf.mxu0
        %v1920 = vadd.f32 0.0, %v1919
        %v1921 = vpop.f32.mrf.mxu0
        %v1922 = vadd.f32 0.0, %v1921
        %v1923 = vpop.f32.mrf.mxu0
        %v1924 = vadd.f32 0.0, %v1923
        %v1925 = vpop.f32.mrf.mxu0
        %v1926 = vadd.f32 0.0, %v1925
        %1927 = vmatprep.mubr.bf16.mxu0 0
        %1928 = vmatmul.mubr.bf16.gmra.mxu0 %v1010
        %v1929 = vpop.f32.mrf.mxu0
        %v1930 = vadd.f32 0.0, %v1929
        %v1931 = vpop.f32.mrf.mxu0
        %v1932 = vadd.f32 0.0, %v1931
        %v1933 = vpop.f32.mrf.mxu0
        %v1934 = vadd.f32 0.0, %v1933
        %v1935 = vpop.f32.mrf.mxu0
        %v1936 = vadd.f32 0.0, %v1935
        %1937 = vmatprep.mubr.bf16.mxu0 0
        %1938 = vmatmul.mubr.bf16.gmra.mxu0 %v1011
        %v1939 = vpop.f32.mrf.mxu0
        %v1940 = vadd.f32 0.0, %v1939
        %v1941 = vpop.f32.mrf.mxu0
        %v1942 = vadd.f32 0.0, %v1941
        %v1943 = vpop.f32.mrf.mxu0
        %v1944 = vadd.f32 0.0, %v1943
        %v1945 = vpop.f32.mrf.mxu0
        %v1946 = vadd.f32 0.0, %v1945
        %1947 = vmatprep.mubr.bf16.mxu0 0
        %1948 = vmatmul.mubr.bf16.gmra.mxu0 %v1012
        %v1949 = vpop.f32.mrf.mxu0
        %v1950 = vadd.f32 0.0, %v1949
        %v1951 = vpop.f32.mrf.mxu0
        %v1952 = vadd.f32 0.0, %v1951
        %v1953 = vpop.f32.mrf.mxu0
        %v1954 = vadd.f32 0.0, %v1953
        %v1955 = vpop.f32.mrf.mxu0
        %v1956 = vadd.f32 0.0, %v1955
        %1957 = vmatprep.mubr.bf16.mxu0 0
        %1958 = vmatmul.mubr.bf16.gmra.mxu0 %v1013
        %v1959 = vpop.f32.mrf.mxu0
        %v1960 = vadd.f32 0.0, %v1959
        %v1961 = vpop.f32.mrf.mxu0
        %v1962 = vadd.f32 0.0, %v1961
        %v1963 = vpop.f32.mrf.mxu0
        %v1964 = vadd.f32 0.0, %v1963
        %v1965 = vpop.f32.mrf.mxu0
        %v1966 = vadd.f32 0.0, %v1965
        %1967 = vmatprep.mubr.bf16.mxu0 0
        %1968 = vmatmul.mubr.bf16.gmra.mxu0 %v1014
        %v1969 = vpop.f32.mrf.mxu0
        %v1970 = vadd.f32 0.0, %v1969
        %v1971 = vpop.f32.mrf.mxu0
        %v1972 = vadd.f32 0.0, %v1971
        %v1973 = vpop.f32.mrf.mxu0
        %v1974 = vadd.f32 0.0, %v1973
        %v1975 = vpop.f32.mrf.mxu0
        %v1976 = vadd.f32 0.0, %v1975
        %1977 = vdwg.mxu0
        %1978 = vmatprep.subr.bf16.mxu0 %v1334
        %1979 = vmatpush1.bf16.msra.mxu0 %v1333
        %1980 = vmatprep.subr.bf16.mxu0 %v1326
        %1981 = vmatpush1.bf16.msra.mxu0 %v1325
        %1982 = vmatprep.subr.bf16.mxu0 %v1318
        %1983 = vmatpush1.bf16.msra.mxu0 %v1317
        %1984 = vmatprep.subr.bf16.mxu0 %v1310
        %1985 = vmatpush1.bf16.msra.mxu0 %v1309
        %1986 = vmatprep.subr.bf16.mxu0 %v1302
        %1987 = vmatpush1.bf16.msra.mxu0 %v1301
        %1988 = vmatprep.subr.bf16.mxu0 %v1294
        %1989 = vmatpush1.bf16.msra.mxu0 %v1293
        %1990 = vmatprep.subr.bf16.mxu0 %v1286
        %1991 = vmatpush1.bf16.msra.mxu0 %v1285
        %1992 = vmatprep.subr.bf16.mxu0 %v1278
        %1993 = vmatpush1.bf16.msra.mxu0 %v1277
        %1994 = vmatprep.subr.bf16.mxu0 0
        %1995 = vmatpush2.bf16.msra.mxu0 0
        %1996 = vmatprep.subr.bf16.mxu0 0
        %1997 = vmatpush2.bf16.msra.mxu0 0
        %1998 = vmatprep.subr.bf16.mxu0 0
        %1999 = vmatpush2.bf16.msra.mxu0 0
        %2000 = vmatprep.subr.bf16.mxu0 0
        %2001 = vmatpush2.bf16.msra.mxu0 0
        %2002 = vmatprep.subr.bf16.mxu0 0
        %2003 = vmatpush2.bf16.msra.mxu0 0
        %2004 = vmatprep.subr.bf16.mxu0 0
        %2005 = vmatpush2.bf16.msra.mxu0 0
        %2006 = vmatprep.subr.bf16.mxu0 0
        %2007 = vmatpush2.bf16.msra.mxu0 0
        %2008 = vmatprep.subr.bf16.mxu0 0
        %2009 = vmatpush2.bf16.msra.mxu0 0
        %2010 = vmatprep.mubr.bf16.mxu0 0
        %2011 = vmatmul.mubr.bf16.gmra.mxu0 %v999
        %v2012 = vpop.f32.mrf.mxu0
        %v2013 = vadd.f32 0.0, %v2012
        %v2014 = vpop.f32.mrf.mxu0
        %v2015 = vadd.f32 0.0, %v2014
        %v2016 = vpop.f32.mrf.mxu0
        %v2017 = vadd.f32 0.0, %v2016
        %v2018 = vpop.f32.mrf.mxu0
        %v2019 = vadd.f32 0.0, %v2018
        %2020 = vmatprep.mubr.bf16.mxu0 0
        %2021 = vmatmul.mubr.bf16.gmra.mxu0 %v1000
        %v2022 = vpop.f32.mrf.mxu0
        %v2023 = vadd.f32 0.0, %v2022
        %v2024 = vpop.f32.mrf.mxu0
        %v2025 = vadd.f32 0.0, %v2024
        %v2026 = vpop.f32.mrf.mxu0
        %v2027 = vadd.f32 0.0, %v2026
        %v2028 = vpop.f32.mrf.mxu0
        %v2029 = vadd.f32 0.0, %v2028
        %2030 = vmatprep.mubr.bf16.mxu0 0
        %2031 = vmatmul.mubr.bf16.gmra.mxu0 %v1001
        %v2032 = vpop.f32.mrf.mxu0
        %v2033 = vadd.f32 0.0, %v2032
        %v2034 = vpop.f32.mrf.mxu0
        %v2035 = vadd.f32 0.0, %v2034
        %v2036 = vpop.f32.mrf.mxu0
        %v2037 = vadd.f32 0.0, %v2036
        %v2038 = vpop.f32.mrf.mxu0
        %v2039 = vadd.f32 0.0, %v2038
        %2040 = vmatprep.mubr.bf16.mxu0 0
        %2041 = vmatmul.mubr.bf16.gmra.mxu0 %v1002
        %v2042 = vpop.f32.mrf.mxu0
        %v2043 = vadd.f32 0.0, %v2042
        %v2044 = vpop.f32.mrf.mxu0
        %v2045 = vadd.f32 0.0, %v2044
        %v2046 = vpop.f32.mrf.mxu0
        %v2047 = vadd.f32 0.0, %v2046
        %v2048 = vpop.f32.mrf.mxu0
        %v2049 = vadd.f32 0.0, %v2048
        %2050 = vmatprep.mubr.bf16.mxu0 0
        %2051 = vmatmul.mubr.bf16.gmra.mxu0 %v1003
        %v2052 = vpop.f32.mrf.mxu0
        %v2053 = vadd.f32 0.0, %v2052
        %v2054 = vpop.f32.mrf.mxu0
        %v2055 = vadd.f32 0.0, %v2054
        %v2056 = vpop.f32.mrf.mxu0
        %v2057 = vadd.f32 0.0, %v2056
        %v2058 = vpop.f32.mrf.mxu0
        %v2059 = vadd.f32 0.0, %v2058
        %2060 = vmatprep.mubr.bf16.mxu0 0
        %2061 = vmatmul.mubr.bf16.gmra.mxu0 %v1004
        %v2062 = vpop.f32.mrf.mxu0
        %v2063 = vadd.f32 0.0, %v2062
        %v2064 = vpop.f32.mrf.mxu0
        %v2065 = vadd.f32 0.0, %v2064
        %v2066 = vpop.f32.mrf.mxu0
        %v2067 = vadd.f32 0.0, %v2066
        %v2068 = vpop.f32.mrf.mxu0
        %v2069 = vadd.f32 0.0, %v2068
        %2070 = vmatprep.mubr.bf16.mxu0 0
        %2071 = vmatmul.mubr.bf16.gmra.mxu0 %v1005
        %v2072 = vpop.f32.mrf.mxu0
        %v2073 = vadd.f32 0.0, %v2072
        %v2074 = vpop.f32.mrf.mxu0
        %v2075 = vadd.f32 0.0, %v2074
        %v2076 = vpop.f32.mrf.mxu0
        %v2077 = vadd.f32 0.0, %v2076
        %v2078 = vpop.f32.mrf.mxu0
        %v2079 = vadd.f32 0.0, %v2078
        %2080 = vmatprep.mubr.bf16.mxu0 0
        %2081 = vmatmul.mubr.bf16.gmra.mxu0 %v1006
        %v2082 = vpop.f32.mrf.mxu0
        %v2083 = vadd.f32 0.0, %v2082
        %v2084 = vpop.f32.mrf.mxu0
        %v2085 = vadd.f32 0.0, %v2084
        %v2086 = vpop.f32.mrf.mxu0
        %v2087 = vadd.f32 0.0, %v2086
        %v2088 = vpop.f32.mrf.mxu0
        %v2089 = vadd.f32 0.0, %v2088
        %2090 = vmatprep.mubr.bf16.mxu0 0
        %2091 = vmatmul.mubr.bf16.gmra.mxu0 %v1007
        %v2092 = vpop.f32.mrf.mxu0
        %v2093 = vadd.f32 0.0, %v2092
        %v2094 = vpop.f32.mrf.mxu0
        %v2095 = vadd.f32 0.0, %v2094
        %v2096 = vpop.f32.mrf.mxu0
        %v2097 = vadd.f32 0.0, %v2096
        %v2098 = vpop.f32.mrf.mxu0
        %v2099 = vadd.f32 0.0, %v2098
        %2100 = vmatprep.mubr.bf16.mxu0 0
        %2101 = vmatmul.mubr.bf16.gmra.mxu0 %v1008
        %v2102 = vpop.f32.mrf.mxu0
        %v2103 = vadd.f32 0.0, %v2102
        %v2104 = vpop.f32.mrf.mxu0
        %v2105 = vadd.f32 0.0, %v2104
        %v2106 = vpop.f32.mrf.mxu0
        %v2107 = vadd.f32 0.0, %v2106
        %v2108 = vpop.f32.mrf.mxu0
        %v2109 = vadd.f32 0.0, %v2108
        %2110 = vmatprep.mubr.bf16.mxu0 0
        %2111 = vmatmul.mubr.bf16.gmra.mxu0 %v1009
        %v2112 = vpop.f32.mrf.mxu0
        %v2113 = vadd.f32 0.0, %v2112
        %v2114 = vpop.f32.mrf.mxu0
        %v2115 = vadd.f32 0.0, %v2114
        %v2116 = vpop.f32.mrf.mxu0
        %v2117 = vadd.f32 0.0, %v2116
        %v2118 = vpop.f32.mrf.mxu0
        %v2119 = vadd.f32 0.0, %v2118
        %2120 = vmatprep.mubr.bf16.mxu0 0
        %2121 = vmatmul.mubr.bf16.gmra.mxu0 %v1010
        %v2122 = vpop.f32.mrf.mxu0
        %v2123 = vadd.f32 0.0, %v2122
        %v2124 = vpop.f32.mrf.mxu0
        %v2125 = vadd.f32 0.0, %v2124
        %v2126 = vpop.f32.mrf.mxu0
        %v2127 = vadd.f32 0.0, %v2126
        %v2128 = vpop.f32.mrf.mxu0
        %v2129 = vadd.f32 0.0, %v2128
        %2130 = vmatprep.mubr.bf16.mxu0 0
        %2131 = vmatmul.mubr.bf16.gmra.mxu0 %v1011
        %v2132 = vpop.f32.mrf.mxu0
        %v2133 = vadd.f32 0.0, %v2132
        %v2134 = vpop.f32.mrf.mxu0
        %v2135 = vadd.f32 0.0, %v2134
        %v2136 = vpop.f32.mrf.mxu0
        %v2137 = vadd.f32 0.0, %v2136
        %v2138 = vpop.f32.mrf.mxu0
        %v2139 = vadd.f32 0.0, %v2138
        %2140 = vmatprep.mubr.bf16.mxu0 0
        %2141 = vmatmul.mubr.bf16.gmra.mxu0 %v1012
        %v2142 = vpop.f32.mrf.mxu0
        %v2143 = vadd.f32 0.0, %v2142
        %v2144 = vpop.f32.mrf.mxu0
        %v2145 = vadd.f32 0.0, %v2144
        %v2146 = vpop.f32.mrf.mxu0
        %v2147 = vadd.f32 0.0, %v2146
        %v2148 = vpop.f32.mrf.mxu0
        %v2149 = vadd.f32 0.0, %v2148
        %2150 = vmatprep.mubr.bf16.mxu0 0
        %2151 = vmatmul.mubr.bf16.gmra.mxu0 %v1013
        %v2152 = vpop.f32.mrf.mxu0
        %v2153 = vadd.f32 0.0, %v2152
        %v2154 = vpop.f32.mrf.mxu0
        %v2155 = vadd.f32 0.0, %v2154
        %v2156 = vpop.f32.mrf.mxu0
        %v2157 = vadd.f32 0.0, %v2156
        %v2158 = vpop.f32.mrf.mxu0
        %v2159 = vadd.f32 0.0, %v2158
        %2160 = vmatprep.mubr.bf16.mxu0 0
        %2161 = vmatmul.mubr.bf16.gmra.mxu0 %v1014
        %v2162 = vpop.f32.mrf.mxu0
        %v2163 = vadd.f32 0.0, %v2162
        %v2164 = vpop.f32.mrf.mxu0
        %v2165 = vadd.f32 0.0, %v2164
        %v2166 = vpop.f32.mrf.mxu0
        %v2167 = vadd.f32 0.0, %v2166
        %v2168 = vpop.f32.mrf.mxu0
        %v2169 = vadd.f32 0.0, %v2168
        %2170 = vdwg.mxu0
        %v2171 = vmax.f32 %v1434, %v1438
        %v2172 = vmax.f32 %v2171, %v1444
        %v2173 = vmax.f32 %v2172, %v1448
        %v2174 = vmax.f32 %v2173, %v1454
        %v2175 = vmax.f32 %v2174, %v1458
        %v2176 = vmax.f32 %v2175, %v1464
        %v2177 = vmax.f32 %v2176, %v1468
        %v2178 = vmax.f32 %v2177, %v1474
        %v2179 = vmax.f32 %v2178, %v1478
        %v2180 = vmax.f32 %v2179, %v1484
        %v2181 = vmax.f32 %v2180, %v1488
        %v2182 = vmax.f32 %v2181, %v1494
        %v2183 = vmax.f32 %v2182, %v1498
        %v2184 = vmax.f32 %v2183, %v1504
        %v2185 = vmax.f32 %v2184, %v1508
        %v2186 = vmax.f32 %v2185, %v1514
        %v2187 = vmax.f32 %v2186, %v1518
        %v2188 = vmax.f32 %v2187, %v1524
        %v2189 = vmax.f32 %v2188, %v1528
        %v2190 = vmax.f32 %v2189, %v1534
        %v2191 = vmax.f32 %v2190, %v1538
        %v2192 = vmax.f32 %v2191, %v1544
        %v2193 = vmax.f32 %v2192, %v1548
        %v2194 = vmax.f32 %v2193, %v1554
        %v2195 = vmax.f32 %v2194, %v1558
        %v2196 = vmax.f32 %v2195, %v1564
        %v2197 = vmax.f32 %v2196, %v1568
        %v2198 = vmax.f32 %v2197, %v1574
        %v2199 = vmax.f32 %v2198, %v1578
        %v2200 = vmax.f32 %v2199, %v1584
        %v2201 = vmax.f32 %v2200, %v1588
        %v2202 = vrot.slane %v2201, 4
        %v2203 = vmax.f32 %v2201, %v2202
        %v2204 = vrot.slane %v2203, 2
        %v2205 = vmax.f32 %v2203, %v2204
        %v2206 = vrot.slane %v2205, 1
        %v2207 = vmax.f32 %v2205, %v2206
        %v2208 = vmax.f32 %v1436, %v1440
        %v2209 = vmax.f32 %v2208, %v1446
        %v2210 = vmax.f32 %v2209, %v1450
        %v2211 = vmax.f32 %v2210, %v1456
        %v2212 = vmax.f32 %v2211, %v1460
        %v2213 = vmax.f32 %v2212, %v1466
        %v2214 = vmax.f32 %v2213, %v1470
        %v2215 = vmax.f32 %v2214, %v1476
        %v2216 = vmax.f32 %v2215, %v1480
        %v2217 = vmax.f32 %v2216, %v1486
        %v2218 = vmax.f32 %v2217, %v1490
        %v2219 = vmax.f32 %v2218, %v1496
        %v2220 = vmax.f32 %v2219, %v1500
        %v2221 = vmax.f32 %v2220, %v1506
        %v2222 = vmax.f32 %v2221, %v1510
        %v2223 = vmax.f32 %v2222, %v1516
        %v2224 = vmax.f32 %v2223, %v1520
        %v2225 = vmax.f32 %v2224, %v1526
        %v2226 = vmax.f32 %v2225, %v1530
        %v2227 = vmax.f32 %v2226, %v1536
        %v2228 = vmax.f32 %v2227, %v1540
        %v2229 = vmax.f32 %v2228, %v1546
        %v2230 = vmax.f32 %v2229, %v1550
        %v2231 = vmax.f32 %v2230, %v1556
        %v2232 = vmax.f32 %v2231, %v1560
        %v2233 = vmax.f32 %v2232, %v1566
        %v2234 = vmax.f32 %v2233, %v1570
        %v2235 = vmax.f32 %v2234, %v1576
        %v2236 = vmax.f32 %v2235, %v1580
        %v2237 = vmax.f32 %v2236, %v1586
        %v2238 = vmax.f32 %v2237, %v1590
        %v2239 = vrot.slane %v2238, 4
        %v2240 = vmax.f32 %v2238, %v2239
        %v2241 = vrot.slane %v2240, 2
        %v2242 = vmax.f32 %v2240, %v2241
        %v2243 = vrot.slane %v2242, 1
        %v2244 = vmax.f32 %v2242, %v2243
        %v2245 = vmax.f32 %v1627, %v1631
        %v2246 = vmax.f32 %v2245, %v1637
        %v2247 = vmax.f32 %v2246, %v1641
        %v2248 = vmax.f32 %v2247, %v1647
        %v2249 = vmax.f32 %v2248, %v1651
        %v2250 = vmax.f32 %v2249, %v1657
        %v2251 = vmax.f32 %v2250, %v1661
        %v2252 = vmax.f32 %v2251, %v1667
        %v2253 = vmax.f32 %v2252, %v1671
        %v2254 = vmax.f32 %v2253, %v1677
        %v2255 = vmax.f32 %v2254, %v1681
        %v2256 = vmax.f32 %v2255, %v1687
        %v2257 = vmax.f32 %v2256, %v1691
        %v2258 = vmax.f32 %v2257, %v1697
        %v2259 = vmax.f32 %v2258, %v1701
        %v2260 = vmax.f32 %v2259, %v1707
        %v2261 = vmax.f32 %v2260, %v1711
        %v2262 = vmax.f32 %v2261, %v1717
        %v2263 = vmax.f32 %v2262, %v1721
        %v2264 = vmax.f32 %v2263, %v1727
        %v2265 = vmax.f32 %v2264, %v1731
        %v2266 = vmax.f32 %v2265, %v1737
        %v2267 = vmax.f32 %v2266, %v1741
        %v2268 = vmax.f32 %v2267, %v1747
        %v2269 = vmax.f32 %v2268, %v1751
        %v2270 = vmax.f32 %v2269, %v1757
        %v2271 = vmax.f32 %v2270, %v1761
        %v2272 = vmax.f32 %v2271, %v1767
        %v2273 = vmax.f32 %v2272, %v1771
        %v2274 = vmax.f32 %v2273, %v1777
        %v2275 = vmax.f32 %v2274, %v1781
        %v2276 = vrot.slane %v2275, 4
        %v2277 = vmax.f32 %v2275, %v2276
        %v2278 = vrot.slane %v2277, 2
        %v2279 = vmax.f32 %v2277, %v2278
        %v2280 = vrot.slane %v2279, 1
        %v2281 = vmax.f32 %v2279, %v2280
        %v2282 = vmax.f32 %v1629, %v1633
        %v2283 = vmax.f32 %v2282, %v1639
        %v2284 = vmax.f32 %v2283, %v1643
        %v2285 = vmax.f32 %v2284, %v1649
        %v2286 = vmax.f32 %v2285, %v1653
        %v2287 = vmax.f32 %v2286, %v1659
        %v2288 = vmax.f32 %v2287, %v1663
        %v2289 = vmax.f32 %v2288, %v1669
        %v2290 = vmax.f32 %v2289, %v1673
        %v2291 = vmax.f32 %v2290, %v1679
        %v2292 = vmax.f32 %v2291, %v1683
        %v2293 = vmax.f32 %v2292, %v1689
        %v2294 = vmax.f32 %v2293, %v1693
        %v2295 = vmax.f32 %v2294, %v1699
        %v2296 = vmax.f32 %v2295, %v1703
        %v2297 = vmax.f32 %v2296, %v1709
        %v2298 = vmax.f32 %v2297, %v1713
        %v2299 = vmax.f32 %v2298, %v1719
        %v2300 = vmax.f32 %v2299, %v1723
        %v2301 = vmax.f32 %v2300, %v1729
        %v2302 = vmax.f32 %v2301, %v1733
        %v2303 = vmax.f32 %v2302, %v1739
        %v2304 = vmax.f32 %v2303, %v1743
        %v2305 = vmax.f32 %v2304, %v1749
        %v2306 = vmax.f32 %v2305, %v1753
        %v2307 = vmax.f32 %v2306, %v1759
        %v2308 = vmax.f32 %v2307, %v1763
        %v2309 = vmax.f32 %v2308, %v1769
        %v2310 = vmax.f32 %v2309, %v1773
        %v2311 = vmax.f32 %v2310, %v1779
        %v2312 = vmax.f32 %v2311, %v1783
        %v2313 = vrot.slane %v2312, 4
        %v2314 = vmax.f32 %v2312, %v2313
        %v2315 = vrot.slane %v2314, 2
        %v2316 = vmax.f32 %v2314, %v2315
        %v2317 = vrot.slane %v2316, 1
        %v2318 = vmax.f32 %v2316, %v2317
        %v2319 = vmax.f32 %v1820, %v1824
        %v2320 = vmax.f32 %v2319, %v1830
        %v2321 = vmax.f32 %v2320, %v1834
        %v2322 = vmax.f32 %v2321, %v1840
        %v2323 = vmax.f32 %v2322, %v1844
        %v2324 = vmax.f32 %v2323, %v1850
        %v2325 = vmax.f32 %v2324, %v1854
        %v2326 = vmax.f32 %v2325, %v1860
        %v2327 = vmax.f32 %v2326, %v1864
        %v2328 = vmax.f32 %v2327, %v1870
        %v2329 = vmax.f32 %v2328, %v1874
        %v2330 = vmax.f32 %v2329, %v1880
        %v2331 = vmax.f32 %v2330, %v1884
        %v2332 = vmax.f32 %v2331, %v1890
        %v2333 = vmax.f32 %v2332, %v1894
        %v2334 = vmax.f32 %v2333, %v1900
        %v2335 = vmax.f32 %v2334, %v1904
        %v2336 = vmax.f32 %v2335, %v1910
        %v2337 = vmax.f32 %v2336, %v1914
        %v2338 = vmax.f32 %v2337, %v1920
        %v2339 = vmax.f32 %v2338, %v1924
        %v2340 = vmax.f32 %v2339, %v1930
        %v2341 = vmax.f32 %v2340, %v1934
        %v2342 = vmax.f32 %v2341, %v1940
        %v2343 = vmax.f32 %v2342, %v1944
        %v2344 = vmax.f32 %v2343, %v1950
        %v2345 = vmax.f32 %v2344, %v1954
        %v2346 = vmax.f32 %v2345, %v1960
        %v2347 = vmax.f32 %v2346, %v1964
        %v2348 = vmax.f32 %v2347, %v1970
        %v2349 = vmax.f32 %v2348, %v1974
        %v2350 = vrot.slane %v2349, 4
        %v2351 = vmax.f32 %v2349, %v2350
        %v2352 = vrot.slane %v2351, 2
        %v2353 = vmax.f32 %v2351, %v2352
        %v2354 = vrot.slane %v2353, 1
        %v2355 = vmax.f32 %v2353, %v2354
        %v2356 = vmax.f32 %v1822, %v1826
        %v2357 = vmax.f32 %v2356, %v1832
        %v2358 = vmax.f32 %v2357, %v1836
        %v2359 = vmax.f32 %v2358, %v1842
        %v2360 = vmax.f32 %v2359, %v1846
        %v2361 = vmax.f32 %v2360, %v1852
        %v2362 = vmax.f32 %v2361, %v1856
        %v2363 = vmax.f32 %v2362, %v1862
        %v2364 = vmax.f32 %v2363, %v1866
        %v2365 = vmax.f32 %v2364, %v1872
        %v2366 = vmax.f32 %v2365, %v1876
        %v2367 = vmax.f32 %v2366, %v1882
        %v2368 = vmax.f32 %v2367, %v1886
        %v2369 = vmax.f32 %v2368, %v1892
        %v2370 = vmax.f32 %v2369, %v1896
        %v2371 = vmax.f32 %v2370, %v1902
        %v2372 = vmax.f32 %v2371, %v1906
        %v2373 = vmax.f32 %v2372, %v1912
        %v2374 = vmax.f32 %v2373, %v1916
        %v2375 = vmax.f32 %v2374, %v1922
        %v2376 = vmax.f32 %v2375, %v1926
        %v2377 = vmax.f32 %v2376, %v1932
        %v2378 = vmax.f32 %v2377, %v1936
        %v2379 = vmax.f32 %v2378, %v1942
        %v2380 = vmax.f32 %v2379, %v1946
        %v2381 = vmax.f32 %v2380, %v1952
        %v2382 = vmax.f32 %v2381, %v1956
        %v2383 = vmax.f32 %v2382, %v1962
        %v2384 = vmax.f32 %v2383, %v1966
        %v2385 = vmax.f32 %v2384, %v1972
        %v2386 = vmax.f32 %v2385, %v1976
        %v2387 = vrot.slane %v2386, 4
        %v2388 = vmax.f32 %v2386, %v2387
        %v2389 = vrot.slane %v2388, 2
        %v2390 = vmax.f32 %v2388, %v2389
        %v2391 = vrot.slane %v2390, 1
        %v2392 = vmax.f32 %v2390, %v2391
        %v2393 = vmax.f32 %v2013, %v2017
        %v2394 = vmax.f32 %v2393, %v2023
        %v2395 = vmax.f32 %v2394, %v2027
        %v2396 = vmax.f32 %v2395, %v2033
        %v2397 = vmax.f32 %v2396, %v2037
        %v2398 = vmax.f32 %v2397, %v2043
        %v2399 = vmax.f32 %v2398, %v2047
        %v2400 = vmax.f32 %v2399, %v2053
        %v2401 = vmax.f32 %v2400, %v2057
        %v2402 = vmax.f32 %v2401, %v2063
        %v2403 = vmax.f32 %v2402, %v2067
        %v2404 = vmax.f32 %v2403, %v2073
        %v2405 = vmax.f32 %v2404, %v2077
        %v2406 = vmax.f32 %v2405, %v2083
        %v2407 = vmax.f32 %v2406, %v2087
        %v2408 = vmax.f32 %v2407, %v2093
        %v2409 = vmax.f32 %v2408, %v2097
        %v2410 = vmax.f32 %v2409, %v2103
        %v2411 = vmax.f32 %v2410, %v2107
        %v2412 = vmax.f32 %v2411, %v2113
        %v2413 = vmax.f32 %v2412, %v2117
        %v2414 = vmax.f32 %v2413, %v2123
        %v2415 = vmax.f32 %v2414, %v2127
        %v2416 = vmax.f32 %v2415, %v2133
        %v2417 = vmax.f32 %v2416, %v2137
        %v2418 = vmax.f32 %v2417, %v2143
        %v2419 = vmax.f32 %v2418, %v2147
        %v2420 = vmax.f32 %v2419, %v2153
        %v2421 = vmax.f32 %v2420, %v2157
        %v2422 = vmax.f32 %v2421, %v2163
        %v2423 = vmax.f32 %v2422, %v2167
        %v2424 = vrot.slane %v2423, 4
        %v2425 = vmax.f32 %v2423, %v2424
        %v2426 = vrot.slane %v2425, 2
        %v2427 = vmax.f32 %v2425, %v2426
        %v2428 = vrot.slane %v2427, 1
        %v2429 = vmax.f32 %v2427, %v2428
        %v2430 = vmax.f32 %v2015, %v2019
        %v2431 = vmax.f32 %v2430, %v2025
        %v2432 = vmax.f32 %v2431, %v2029
        %v2433 = vmax.f32 %v2432, %v2035
        %v2434 = vmax.f32 %v2433, %v2039
        %v2435 = vmax.f32 %v2434, %v2045
        %v2436 = vmax.f32 %v2435, %v2049
        %v2437 = vmax.f32 %v2436, %v2055
        %v2438 = vmax.f32 %v2437, %v2059
        %v2439 = vmax.f32 %v2438, %v2065
        %v2440 = vmax.f32 %v2439, %v2069
        %v2441 = vmax.f32 %v2440, %v2075
        %v2442 = vmax.f32 %v2441, %v2079
        %v2443 = vmax.f32 %v2442, %v2085
        %v2444 = vmax.f32 %v2443, %v2089
        %v2445 = vmax.f32 %v2444, %v2095
        %v2446 = vmax.f32 %v2445, %v2099
        %v2447 = vmax.f32 %v2446, %v2105
        %v2448 = vmax.f32 %v2447, %v2109
        %v2449 = vmax.f32 %v2448, %v2115
        %v2450 = vmax.f32 %v2449, %v2119
        %v2451 = vmax.f32 %v2450, %v2125
        %v2452 = vmax.f32 %v2451, %v2129
        %v2453 = vmax.f32 %v2452, %v2135
        %v2454 = vmax.f32 %v2453, %v2139
        %v2455 = vmax.f32 %v2454, %v2145
        %v2456 = vmax.f32 %v2455, %v2149
        %v2457 = vmax.f32 %v2456, %v2155
        %v2458 = vmax.f32 %v2457, %v2159
        %v2459 = vmax.f32 %v2458, %v2165
        %v2460 = vmax.f32 %v2459, %v2169
        %v2461 = vrot.slane %v2460, 4
        %v2462 = vmax.f32 %v2460, %v2461
        %v2463 = vrot.slane %v2462, 2
        %v2464 = vmax.f32 %v2462, %v2463
        %v2465 = vrot.slane %v2464, 1
        %v2466 = vmax.f32 %v2464, %v2465
        %v2467 = vld [vmem:[%s6] sm:$0xff]
        %v2469 = vlaneseq
        %v2470 = vshrl.u32 %v2469, 7
        %v2471 = vsub.s32 0, %v2470
        %v2472 = vrot.slane %v2467, %v2471
        %v2473 = vlaneseq
        %v2474 = vshrl.u32 %v2473, 7
        %v2475 = vsub.s32 1, %v2474
        %v2476 = vrot.slane %v2467, %v2475
        %v2477 = vlaneseq
        %v2478 = vshrl.u32 %v2477, 7
        %v2479 = vsub.s32 2, %v2478
        %v2480 = vrot.slane %v2467, %v2479
        %v2481 = vlaneseq
        %v2482 = vshrl.u32 %v2481, 7
        %v2483 = vsub.s32 3, %v2482
        %v2484 = vrot.slane %v2467, %v2483
        %v2485 = vlaneseq
        %v2486 = vshrl.u32 %v2485, 7
        %v2487 = vsub.s32 4, %v2486
        %v2488 = vrot.slane %v2467, %v2487
        %v2489 = vlaneseq
        %v2490 = vshrl.u32 %v2489, 7
        %v2491 = vsub.s32 5, %v2490
        %v2492 = vrot.slane %v2467, %v2491
        %v2493 = vlaneseq
        %v2494 = vshrl.u32 %v2493, 7
        %v2495 = vsub.s32 6, %v2494
        %v2496 = vrot.slane %v2467, %v2495
        %v2497 = vlaneseq
        %v2498 = vshrl.u32 %v2497, 7
        %v2499 = vsub.s32 7, %v2498
        %v2500 = vrot.slane %v2467, %v2499
        %v2509 = vadd.f32 %v2207, %v2472
        %v2510 = vadd.f32 %v2244, %v2476
        %v2511 = vadd.f32 %v2281, %v2480
        %v2512 = vadd.f32 %v2318, %v2484
        %v2513 = vadd.f32 %v2355, %v2488
        %v2514 = vadd.f32 %v2392, %v2492
        %v2515 = vadd.f32 %v2429, %v2496
        %v2516 = vadd.f32 %v2466, %v2500
        %v2517 = vld [vmem:[%s309] sm:$0xff]
        %v2526 = vcombine.low %v2509, %v2510
        %v2527 = vcombine.low %v2511, %v2512
        %v2528 = vcombine.low %v2513, %v2514
        %v2529 = vcombine.low %v2515, %v2516
        %v2531 = vunpack.c.l.s4 1966171168
        %v2532 = vunpack.c.0.s8 %v2531
        %v2533 = vlaneseq
        %v2534 = vshrl.u32 %v2533, 7
        %v2535 = vsub.s32 %v2532, %v2534
        %v2536 = vrot.slane %v2526, %v2535
        %v2538 = vunpack.c.l.s4 1966171168
        %v2539 = vunpack.c.0.s8 %v2538
        %v2540 = vlaneseq
        %v2541 = vshrl.u32 %v2540, 7
        %v2542 = vsub.s32 %v2539, %v2541
        %v2543 = vrot.slane %v2527, %v2542
        %v2545 = vunpack.c.l.s4 1966171168
        %v2546 = vunpack.c.0.s8 %v2545
        %v2547 = vlaneseq
        %v2548 = vshrl.u32 %v2547, 7
        %v2549 = vsub.s32 %v2546, %v2548
        %v2550 = vrot.slane %v2528, %v2549
        %v2552 = vunpack.c.l.s4 1966171168
        %v2553 = vunpack.c.0.s8 %v2552
        %v2554 = vlaneseq
        %v2555 = vshrl.u32 %v2554, 7
        %v2556 = vsub.s32 %v2553, %v2555
        %v2557 = vrot.slane %v2529, %v2556
        %v2558 = vcombine.low %v2536, %v2543
        %v2559 = vcombine.low %v2550, %v2557
        %v2561 = vunpack.c.l.s4 1966171168
        %v2562 = vunpack.c.0.s8 %v2561
        %v2563 = vlaneseq
        %v2564 = vshrl.u32 %v2563, 7
        %v2565 = vsub.s32 %v2562, %v2564
        %v2566 = vrot.slane %v2558, %v2565
        %v2568 = vunpack.c.l.s4 1966171168
        %v2569 = vunpack.c.0.s8 %v2568
        %v2570 = vlaneseq
        %v2571 = vshrl.u32 %v2570, 7
        %v2572 = vsub.s32 %v2569, %v2571
        %v2573 = vrot.slane %v2559, %v2572
        %v2574 = vcombine.low %v2566, %v2573
        %v2576 = vmax.f32 %v2517, %v2574
        %2577 = vst [vmem:[%s309] sm:$0xff] %v2576
        %s2578 = sand.u32 %s196, 1
        %s2579 = scalar_lea.sflag [#allocation4], %s2578
        %s2580 = sand.u32 %s196, 1
        %s2581 = smul.addr %s2580, 8
        %s2582 = scalar_lea.vmem [#allocation5], %s2581
        // Predicated region
        $region57: #{tpu_custom_call.1} parent=47 // pred_check
          %p2583 = pneg %p206
        $region58: #{tpu_custom_call.1} parent=47 // pred_check_branch
          %2585 = sbr.rel (%p2583) target = $region60
        $region59: #{tpu_custom_call.1} parent=47 // pred_region
          %s2587 = ssub.s32 128, 128
          %2588 = vsyncadd %s2579, %s2587
          %s2589 = smul.addr %s26, 8
          %s2590 = smul.addr %s2589, 16
          %s2591 = scalar_lea.hbm %s7, %s2590
          %s2593 = sshll.u32 %s2582, 4
          %s2594 = int_to_ptr.vmem [resolvable:$true] %s2593
          %2596 = dma.vmem_to_hbm [thread:$0]  %s2594, 128, %s2591, %s2579
        $region60: #{tpu_custom_call.1} parent=47 // pred_fallthru
          _
      $region48: #{tpu_custom_call.1} parent=5 // pred_fallthru
        _
      %p2597 = scmp.le.s32.totalorder 2, %s17
      // Predicated region
      $region61: #{tpu_custom_call.1} parent=5 // pred_check
        %p2598 = pneg %p2597
      $region62: #{tpu_custom_call.1} parent=5 // pred_check_branch
        %2600 = sbr.rel (%p2598) target = $region64
      $region63: #{tpu_custom_call.1} parent=5 // pred_region
        %s2601 = ssub.s32 %s17, 2
        // Predicated region
        $region65: #{tpu_custom_call.1} parent=63 // pred_check
          %p2602 = pneg %p212
        $region66: #{tpu_custom_call.1} parent=63 // pred_check_branch
          %2604 = sbr.rel (%p2602) target = $region68
        $region67: #{tpu_custom_call.1} parent=63 // pred_region
          %s2605 = sand.u32 %s197, 1
          %s2606 = scalar_lea.sflag [#allocation4], %s2605
          %s2607 = sand.u32 %s197, 1
          %s2608 = smul.addr %s2607, 8
          %s2609 = scalar_lea.vmem [#allocation5], %s2608
          %2610 = dma.done %s2606, 128
        $region68: #{tpu_custom_call.1} parent=63 // pred_fallthru
          _
      $region64: #{tpu_custom_call.1} parent=5 // pred_fallthru
        _
    $region6: #{tpu_custom_call.1} parent=1 // loop_footer
      %s21 = sadd.s32 1, %s17
    $region7: #{tpu_custom_call.1} parent=1 // loop_footer_branch
      %16 = sbr.rel target = $region3
    $region8: #{tpu_custom_call.1} parent=1 // loop_exit
      _
    %2611 = vsyncpa [#allocation3], 1
    %s2612 = scalar_lea.sflag [#allocation3], 1
    %2613 = vsyncpa %s2612, 1
    %2614 = vsyncpa [#allocation4], 1
    %s2615 = scalar_lea.sflag [#allocation4], 1
    %2616 = vsyncpa %s2615, 1

</llo_original>
